<compile_context>
chip_gen: v6e
topology: v6e:2x2x1
jax: 0.10.0
libtpu: 0.0.40
codegen_flags: <defaults>
</compile_context>

<pallas_src>
import functools
import math

import jax
import jax.numpy as jnp
import numpy as np
from jax import lax
from jax.experimental import pallas as pl
from jax.experimental.pallas import tpu as pltpu


def _choose_tile(dim, target, align):
    """Largest divisor of `dim` that is a multiple of `align` and <= target (else dim)."""
    if dim <= target:
        return dim
    t = (target // align) * align
    while t >= align:
        if dim % t == 0:
            return t
        t -= align
    return dim


def _rbf_attention_kernel(q_ref, k_ref, v_ref, klen_ref, o_ref, acc_ref, den_ref,
                          *, temp, eps, num_heads):
    # q_ref: (H, tL, E), k_ref: (H, tS, E), v_ref: (tS, H, D), klen_ref: (1, tS)
    # o_ref: (tL, H, D); scratch: acc_ref (H, tL, D) f32, den_ref (H, tL, 1) f32.
    si = pl.program_id(2)

    @pl.when(si == 0)
    def _():
        acc_ref[...] = jnp.zeros_like(acc_ref)
        den_ref[...] = jnp.zeros_like(den_ref)

    klen = klen_ref[...].astype(jnp.float32)                       # (1, tS)

    for h in range(num_heads):                                     # static unroll over heads
        q = q_ref[h]                                               # (tL, E), native dtype
        k = k_ref[h]                                               # (tS, E), native dtype
        v = v_ref[:, h, :]                                         # (tS, D), native dtype

        # ||q_i - k_j||^2 via the MXU; operands stay in the input dtype,
        # accumulation in f32.  dot_general expresses the contracted-RHS form
        # directly (no k.T materialization).
        qk = lax.dot_general(q, k, (((1,), (1,)), ((), ())),
                             preferred_element_type=jnp.float32)   # (tL, tS)
        qf = q.astype(jnp.float32)
        kf = k.astype(jnp.float32)
        q_sq = jnp.sum(qf * qf, axis=-1, keepdims=True)            # (tL, 1)
        k_sq = jnp.sum(kf * kf, axis=-1, keepdims=True).T          # (1, tS)
        sq_dist = jnp.maximum(q_sq + k_sq - 2.0 * qk, 0.0)         # (tL, tS)

        # RBF kernel matrix + key-length masking (kept in f32 on the VPU/EUP).
        phi = jnp.exp(sq_dist * (-0.5 * temp)) * klen              # (tL, tS), phi <= 1

        den_ref[h] += jnp.sum(phi, axis=-1, keepdims=True)         # (tL, 1)
        acc_ref[h] += jnp.dot(phi.astype(v.dtype), v,
                              preferred_element_type=jnp.float32)  # (tL, D)

    # Normalize only after the last S chunk (phi <= 1, no online rescaling
    # needed) and scale the small (tL, D) tile instead of the (tL, tS) one.
    @pl.when(si == pl.num_programs(2) - 1)
    def _():
        for h in range(num_heads):
            z = pl.reciprocal(den_ref[h] + eps, approx=True)       # (tL, 1)
            o_ref[:, h, :] = (acc_ref[h] * z).astype(o_ref.dtype)


def rbf_kernel_attention(queries, keys, values, key_lengths_mask,
                         softmax_temp=None, eps=1e-6):
    """JAX/Pallas equivalent of RBFKernelAttention.forward.

    attn_mask is assumed all-ones (the PyTorch module raises otherwise).
    key_lengths_mask is the (N, S) float matrix (key_lengths.float_matrix).
    """
    N, L, H, E = queries.shape
    _, S, _, D = values.shape
    temp = float(softmax_temp) if softmax_temp is not None else 1.0 / math.sqrt(E)

    # torch's .view(N, H, L, E) on a contiguous (N, L, H, E) tensor is a raw
    # row-major reshape (NOT a permute); reproduce that exact semantics.
    # These reshapes (and (N,S)->(N,1,S)) are free -- no HBM relayout traffic.
    q = jnp.reshape(queries, (N, H, L, E))
    k = jnp.reshape(keys, (N, H, S, E))
    klen = jnp.reshape(key_lengths_mask.astype(jnp.float32), (N, 1, S))

    # Sequence tiling bounds live VMEM state to (tL, tS) per step so long
    # sequences pipeline instead of blowing VMEM (esp. v7x's 64 MiB).
    tl = _choose_tile(L, 256, 8)      # sublane-aligned L tile
    ts = _choose_tile(S, 512, 128)    # lane-aligned S tile (also klen lane dim)
    n_l, n_s = L // tl, S // ts

    out_dtype = values.dtype
    bytes_accessed = (q.size * q.dtype.itemsize + k.size * k.dtype.itemsize
                      + values.size * values.dtype.itemsize + klen.size * 4
                      + N * L * H * D * jnp.dtype(out_dtype).itemsize)
    cost = pl.CostEstimate(flops=2 * N * H * L * S * (E + D),
                           transcendentals=N * H * L * S,
                           bytes_accessed=bytes_accessed)

    kernel = functools.partial(_rbf_attention_kernel, temp=temp, eps=eps, num_heads=H)

    out = pl.pallas_call(
        kernel,
        out_shape=jax.ShapeDtypeStruct((N, L, H, D), out_dtype),
        grid=(N, n_l, n_s),
        in_specs=[
            pl.BlockSpec((None, H, tl, E), lambda n, li, si: (n, 0, li, 0)),  # q  (N,H,L,E)
            pl.BlockSpec((None, H, ts, E), lambda n, li, si: (n, 0, si, 0)),  # k  (N,H,S,E)
            pl.BlockSpec((None, ts, H, D), lambda n, li, si: (n, si, 0, 0)),  # v  (N,S,H,D) native
            pl.BlockSpec((None, 1, ts),    lambda n, li, si: (n, 0, si)),     # key mask (N,1,S)
        ],
        out_specs=pl.BlockSpec((None, tl, H, D), lambda n, li, si: (n, li, 0, 0)),
        scratch_shapes=[
            pltpu.VMEM((H, tl, D), jnp.float32),   # weighted-value accumulator
            pltpu.VMEM((H, tl, 1), jnp.float32),   # kernel-row-sum accumulator
        ],
        compiler_params=pltpu.CompilerParams(
            dimension_semantics=("parallel", "parallel", "arbitrary"),
            vmem_limit_bytes=64 * 1024 * 1024),
        cost_estimate=cost,
    )(q, k, values, klen)

    return out   # already (N, L, H, D): no wrapper transpose needed


def _reference(queries, keys, values, key_lengths_mask, softmax_temp=None, eps=1e-6):
    """Pure-JAX reference mirroring the PyTorch forward exactly."""
    N, L, H, E = queries.shape
    _, S, _, D = values.shape
    temp = softmax_temp if softmax_temp is not None else 1.0 / math.sqrt(E)
    q = jnp.reshape(queries, (N, H, L, E)).astype(jnp.float32)
    k = jnp.reshape(keys, (N, H, S, E)).astype(jnp.float32)
    diff = q[:, :, :, None, :] - k[:, :, None, :, :]
    sq = jnp.sum(diff * diff, axis=-1)                          # (N, H, L, S)
    phi = jnp.exp(-temp * sq / 2.0)
    phi = phi * key_lengths_mask.astype(jnp.float32)[:, None, None, :]
    z = 1.0 / (jnp.sum(phi, axis=-1) + eps)                     # (N, H, L)
    return jnp.einsum('nhls,nshd,nhl->nlhd', phi, values.astype(jnp.float32), z)


if __name__ == "__main__":
    N, L, S, H, E, D = 2, 8, 8, 4, 32, 32
    key = jax.random.PRNGKey(0)
    kq, kk, kv = jax.random.split(key, 3)
    queries = jax.random.normal(kq, (N, L, H, E), dtype=jnp.float32)
    keys = jax.random.normal(kk, (N, S, H, E), dtype=jnp.float32)
    values = jax.random.normal(kv, (N, S, H, D), dtype=jnp.float32)

    # key_lengths.float_matrix: (N, S) {0,1} mask from per-sample key lengths.
    lengths = jnp.array([S, S - 2], dtype=jnp.int32)
    key_lengths_mask = (jnp.arange(S)[None, :] < lengths[:, None]).astype(jnp.float32)
    # TODO(synk): attn_mask is assumed all-ones (the module only supports that
    # case); EventDispatcher has no effect on the forward math and is omitted.

    out = rbf_kernel_attention(queries, keys, values, key_lengths_mask)
    out = jax.block_until_ready(out)

    ref = _reference(queries, keys, values, key_lengths_mask)
    assert out.shape == (N, L, H, D)
    # Tolerance slightly loosened vs pure-f32 because the kernel normalizes
    # with pl.reciprocal(..., approx=True) on the EUP.
    np.testing.assert_allclose(np.asarray(out), np.asarray(ref), rtol=5e-3, atol=5e-3)

    print("KERNEL_OK")
</pallas_src>

<mosaic_0001>
module attributes {stable_mosaic.version = 11 : i64} {
  func.func @_rbf_attention_kernel(%arg0: i32, %arg1: i32, %arg2: i32, %arg3: memref<1x4x8x32xf32, #tpu.memory_space<vmem>>, %arg4: memref<1x4x8x32xf32, #tpu.memory_space<vmem>>, %arg5: memref<1x8x4x32xf32, #tpu.memory_space<vmem>>, %arg6: memref<1x1x8xf32, #tpu.memory_space<vmem>>, %arg7: memref<1x8x4x32xf32, #tpu.memory_space<vmem>>, %arg8: memref<4x8x32xf32, #tpu.memory_space<vmem>>, %arg9: memref<4x8x1xf32, #tpu.memory_space<vmem>>) attributes {dimension_semantics = [#tpu.dimension_semantics<parallel>, #tpu.dimension_semantics<parallel>, #tpu.dimension_semantics<arbitrary>], iteration_bounds = array<i64: 2, 1, 1>, scalar_prefetch = 0 : i64, scratch_operands = 2 : i64, tpu.core_type = #tpu.core_type<tc>, window_params = [{transform_indices = @transform_0, window_bounds = array<i64: 1, 4, 8, 32>}, {transform_indices = @transform_1, window_bounds = array<i64: 1, 4, 8, 32>}, {transform_indices = @transform_2, window_bounds = array<i64: 1, 8, 4, 32>}, {transform_indices = @transform_3, window_bounds = array<i64: 1, 1, 8>}, {transform_indices = @transform_4, window_bounds = array<i64: 1, 8, 4, 32>}]} {
    %c0_i32 = arith.constant 0 : i32
    %0 = arith.cmpi eq, %arg2, %c0_i32 : i32
    %1 = arith.extui %0 : i1 to i32
    %c0_i32_0 = arith.constant 0 : i32
    %2 = arith.cmpi ne, %1, %c0_i32_0 : i32
    scf.if %2 {
      %cst_129 = arith.constant 0.000000e+00 : f32
      %176 = vector.broadcast %cst_129 : f32 to vector<4x8x32xf32>
      %c0_130 = arith.constant 0 : index
      %c0_131 = arith.constant 0 : index
      %c0_132 = arith.constant 0 : index
      %177 = vector.load %arg8[%c0_130, %c0_131, %c0_132] : memref<4x8x32xf32, #tpu.memory_space<vmem>>, vector<4x8x32xf32>
      tpu.vector_store %arg8[%c0_130, %c0_131, %c0_132], %176 {strides = array<i32>} : memref<4x8x32xf32, #tpu.memory_space<vmem>>, vector<4x8x32xf32>,
      %cst_133 = arith.constant 0.000000e+00 : f32
      %178 = vector.broadcast %cst_133 : f32 to vector<4x8x1xf32>
      %c0_134 = arith.constant 0 : index
      %c0_135 = arith.constant 0 : index
      %c0_136 = arith.constant 0 : index
      %179 = vector.load %arg9[%c0_134, %c0_135, %c0_136] : memref<4x8x1xf32, #tpu.memory_space<vmem>>, vector<4x8x1xf32>
      tpu.vector_store %arg9[%c0_134, %c0_135, %c0_136], %178 {strides = array<i32>} : memref<4x8x1xf32, #tpu.memory_space<vmem>>, vector<4x8x1xf32>,
    } else {
    }
    %c0 = arith.constant 0 : index
    %c0_1 = arith.constant 0 : index
    %c0_2 = arith.constant 0 : index
    %3 = vector.load %arg6[%c0, %c0_1, %c0_2] : memref<1x1x8xf32, #tpu.memory_space<vmem>>, vector<1x1x8xf32>
    %4 = vector.shape_cast %3 : vector<1x1x8xf32> to vector<1x8xf32>
    %c0_3 = arith.constant 0 : index
    %c0_4 = arith.constant 0 : index
    %c0_5 = arith.constant 0 : index
    %c0_6 = arith.constant 0 : index
    %5 = vector.load %arg3[%c0_3, %c0_4, %c0_5, %c0_6] : memref<1x4x8x32xf32, #tpu.memory_space<vmem>>, vector<1x1x8x32xf32>
    %6 = vector.shape_cast %5 : vector<1x1x8x32xf32> to vector<8x32xf32>
    %c0_7 = arith.constant 0 : index
    %c0_8 = arith.constant 0 : index
    %c0_9 = arith.constant 0 : index
    %c0_10 = arith.constant 0 : index
    %7 = vector.load %arg4[%c0_7, %c0_8, %c0_9, %c0_10] : memref<1x4x8x32xf32, #tpu.memory_space<vmem>>, vector<1x1x8x32xf32>
    %8 = vector.shape_cast %7 : vector<1x1x8x32xf32> to vector<8x32xf32>
    %c0_11 = arith.constant 0 : index
    %c0_12 = arith.constant 0 : index
    %c0_13 = arith.constant 0 : index
    %c0_14 = arith.constant 0 : index
    %9 = vector.load %arg5[%c0_11, %c0_12, %c0_13, %c0_14] : memref<1x8x4x32xf32, #tpu.memory_space<vmem>>, vector<1x8x1x32xf32>
    %10 = vector.shape_cast %9 : vector<1x8x1x32xf32> to vector<8x32xf32>
    %cst = arith.constant dense<0.000000e+00> : vector<8x8xf32>
    %11 = tpu.matmul %6, %8, %cst {dimension_numbers = #tpu.dot_dimension_numbers<[1], [1], [0], [0], [0, 0, 1, 0], [], []>} : vector<8x32xf32>, vector<8x32xf32>, vector<8x8xf32> -> vector<8x8xf32>
    %12 = arith.mulf %6, %6 : vector<8x32xf32>
    %cst_15 = arith.constant dense<0.000000e+00> : vector<8xf32>
    %13 = vector.multi_reduction <add>, %12, %cst_15 [1] : vector<8x32xf32> to vector<8xf32>
    %14 = vector.shape_cast %13 : vector<8xf32> to vector<8x1xf32>
    %15 = arith.mulf %8, %8 : vector<8x32xf32>
    %cst_16 = arith.constant dense<0.000000e+00> : vector<8xf32>
    %16 = vector.multi_reduction <add>, %15, %cst_16 [1] : vector<8x32xf32> to vector<8xf32>
    %17 = vector.shape_cast %16 : vector<8xf32> to vector<8x1xf32>
    %18 = tpu.transpose %17, [1, 0] : vector<8x1xf32> -> vector<1x8xf32>
    %19 = vector.broadcast %14 : vector<8x1xf32> to vector<8x8xf32>
    %20 = vector.broadcast %18 : vector<1x8xf32> to vector<8x8xf32>
    %21 = arith.addf %19, %20 : vector<8x8xf32>
    %cst_17 = arith.constant 2.000000e+00 : f32
    %22 = vector.broadcast %cst_17 : f32 to vector<8x8xf32>
    %23 = arith.mulf %22, %11 : vector<8x8xf32>
    %24 = arith.subf %21, %23 : vector<8x8xf32>
    %cst_18 = arith.constant 0.000000e+00 : f32
    %25 = vector.broadcast %cst_18 : f32 to vector<8x8xf32>
    %26 = arith.maximumf %24, %25 : vector<8x8xf32>
    %cst_19 = arith.constant -0.0883883461 : f32
    %27 = vector.broadcast %cst_19 : f32 to vector<8x8xf32>
    %28 = arith.mulf %26, %27 : vector<8x8xf32>
    %29 = math.exp %28 : vector<8x8xf32>
    %30 = vector.broadcast %4 : vector<1x8xf32> to vector<8x8xf32>
    %31 = arith.mulf %29, %30 : vector<8x8xf32>
    %c0_20 = arith.constant 0 : index
    %c0_21 = arith.constant 0 : index
    %c0_22 = arith.constant 0 : index
    %32 = vector.load %arg9[%c0_20, %c0_21, %c0_22] : memref<4x8x1xf32, #tpu.memory_space<vmem>>, vector<1x8x1xf32>
    %33 = vector.shape_cast %32 : vector<1x8x1xf32> to vector<8x1xf32>
    %cst_23 = arith.constant dense<0.000000e+00> : vector<8xf32>
    %34 = vector.multi_reduction <add>, %31, %cst_23 [1] : vector<8x8xf32> to vector<8xf32>
    %35 = vector.shape_cast %34 : vector<8xf32> to vector<8x1xf32>
    %36 = arith.addf %33, %35 : vector<8x1xf32>
    %c0_24 = arith.constant 0 : index
    %c0_25 = arith.constant 0 : index
    %c0_26 = arith.constant 0 : index
    %37 = vector.load %arg9[%c0_24, %c0_25, %c0_26] : memref<4x8x1xf32, #tpu.memory_space<vmem>>, vector<1x8x1xf32>
    %38 = vector.shape_cast %37 : vector<1x8x1xf32> to vector<8x1xf32>
    %39 = vector.shape_cast %36 : vector<8x1xf32> to vector<1x8x1xf32>
    tpu.vector_store %arg9[%c0_24, %c0_25, %c0_26], %39 {strides = array<i32>} : memref<4x8x1xf32, #tpu.memory_space<vmem>>, vector<1x8x1xf32>,
    %c0_27 = arith.constant 0 : index
    %c0_28 = arith.constant 0 : index
    %c0_29 = arith.constant 0 : index
    %40 = vector.load %arg8[%c0_27, %c0_28, %c0_29] : memref<4x8x32xf32, #tpu.memory_space<vmem>>, vector<1x8x32xf32>
    %41 = vector.shape_cast %40 : vector<1x8x32xf32> to vector<8x32xf32>
    %cst_30 = arith.constant dense<0.000000e+00> : vector<8x32xf32>
    %42 = tpu.matmul %31, %10, %cst_30 {dimension_numbers = #tpu.dot_dimension_numbers<[1], [0], [0], [1], [0, 0, 1, 1], [], []>} : vector<8x8xf32>, vector<8x32xf32>, vector<8x32xf32> -> vector<8x32xf32>
    %43 = arith.addf %41, %42 : vector<8x32xf32>
    %c0_31 = arith.constant 0 : index
    %c0_32 = arith.constant 0 : index
    %c0_33 = arith.constant 0 : index
    %44 = vector.load %arg8[%c0_31, %c0_32, %c0_33] : memref<4x8x32xf32, #tpu.memory_space<vmem>>, vector<1x8x32xf32>
    %45 = vector.shape_cast %44 : vector<1x8x32xf32> to vector<8x32xf32>
    %46 = vector.shape_cast %43 : vector<8x32xf32> to vector<1x8x32xf32>
    tpu.vector_store %arg8[%c0_31, %c0_32, %c0_33], %46 {strides = array<i32>} : memref<4x8x32xf32, #tpu.memory_space<vmem>>, vector<1x8x32xf32>,
    %c0_34 = arith.constant 0 : index
    %c1 = arith.constant 1 : index
    %c0_35 = arith.constant 0 : index
    %c0_36 = arith.constant 0 : index
    %47 = vector.load %arg3[%c0_34, %c1, %c0_35, %c0_36] : memref<1x4x8x32xf32, #tpu.memory_space<vmem>>, vector<1x1x8x32xf32>
    %48 = vector.shape_cast %47 : vector<1x1x8x32xf32> to vector<8x32xf32>
    %c0_37 = arith.constant 0 : index
    %c1_38 = arith.constant 1 : index
    %c0_39 = arith.constant 0 : index
    %c0_40 = arith.constant 0 : index
    %49 = vector.load %arg4[%c0_37, %c1_38, %c0_39, %c0_40] : memref<1x4x8x32xf32, #tpu.memory_space<vmem>>, vector<1x1x8x32xf32>
    %50 = vector.shape_cast %49 : vector<1x1x8x32xf32> to vector<8x32xf32>
    %c0_41 = arith.constant 0 : index
    %c0_42 = arith.constant 0 : index
    %c1_43 = arith.constant 1 : index
    %c0_44 = arith.constant 0 : index
    %51 = vector.load %arg5[%c0_41, %c0_42, %c1_43, %c0_44] : memref<1x8x4x32xf32, #tpu.memory_space<vmem>>, vector<1x8x1x32xf32>
    %52 = vector.shape_cast %51 : vector<1x8x1x32xf32> to vector<8x32xf32>
    %cst_45 = arith.constant dense<0.000000e+00> : vector<8x8xf32>
    %53 = tpu.matmul %48, %50, %cst_45 {dimension_numbers = #tpu.dot_dimension_numbers<[1], [1], [0], [0], [0, 0, 1, 0], [], []>} : vector<8x32xf32>, vector<8x32xf32>, vector<8x8xf32> -> vector<8x8xf32>
    %54 = arith.mulf %48, %48 : vector<8x32xf32>
    %cst_46 = arith.constant dense<0.000000e+00> : vector<8xf32>
    %55 = vector.multi_reduction <add>, %54, %cst_46 [1] : vector<8x32xf32> to vector<8xf32>
    %56 = vector.shape_cast %55 : vector<8xf32> to vector<8x1xf32>
    %57 = arith.mulf %50, %50 : vector<8x32xf32>
    %cst_47 = arith.constant dense<0.000000e+00> : vector<8xf32>
    %58 = vector.multi_reduction <add>, %57, %cst_47 [1] : vector<8x32xf32> to vector<8xf32>
    %59 = vector.shape_cast %58 : vector<8xf32> to vector<8x1xf32>
    %60 = tpu.transpose %59, [1, 0] : vector<8x1xf32> -> vector<1x8xf32>
    %61 = vector.broadcast %56 : vector<8x1xf32> to vector<8x8xf32>
    %62 = vector.broadcast %60 : vector<1x8xf32> to vector<8x8xf32>
    %63 = arith.addf %61, %62 : vector<8x8xf32>
    %cst_48 = arith.constant 2.000000e+00 : f32
    %64 = vector.broadcast %cst_48 : f32 to vector<8x8xf32>
    %65 = arith.mulf %64, %53 : vector<8x8xf32>
    %66 = arith.subf %63, %65 : vector<8x8xf32>
    %cst_49 = arith.constant 0.000000e+00 : f32
    %67 = vector.broadcast %cst_49 : f32 to vector<8x8xf32>
    %68 = arith.maximumf %66, %67 : vector<8x8xf32>
    %cst_50 = arith.constant -0.0883883461 : f32
    %69 = vector.broadcast %cst_50 : f32 to vector<8x8xf32>
    %70 = arith.mulf %68, %69 : vector<8x8xf32>
    %71 = math.exp %70 : vector<8x8xf32>
    %72 = vector.broadcast %4 : vector<1x8xf32> to vector<8x8xf32>
    %73 = arith.mulf %71, %72 : vector<8x8xf32>
    %c1_51 = arith.constant 1 : index
    %c0_52 = arith.constant 0 : index
    %c0_53 = arith.constant 0 : index
    %74 = vector.load %arg9[%c1_51, %c0_52, %c0_53] : memref<4x8x1xf32, #tpu.memory_space<vmem>>, vector<1x8x1xf32>
    %75 = vector.shape_cast %74 : vector<1x8x1xf32> to vector<8x1xf32>
    %cst_54 = arith.constant dense<0.000000e+00> : vector<8xf32>
    %76 = vector.multi_reduction <add>, %73, %cst_54 [1] : vector<8x8xf32> to vector<8xf32>
    %77 = vector.shape_cast %76 : vector<8xf32> to vector<8x1xf32>
    %78 = arith.addf %75, %77 : vector<8x1xf32>
    %c1_55 = arith.constant 1 : index
    %c0_56 = arith.constant 0 : index
    %c0_57 = arith.constant 0 : index
    %79 = vector.load %arg9[%c1_55, %c0_56, %c0_57] : memref<4x8x1xf32, #tpu.memory_space<vmem>>, vector<1x8x1xf32>
    %80 = vector.shape_cast %79 : vector<1x8x1xf32> to vector<8x1xf32>
    %81 = vector.shape_cast %78 : vector<8x1xf32> to vector<1x8x1xf32>
    tpu.vector_store %arg9[%c1_55, %c0_56, %c0_57], %81 {strides = array<i32>} : memref<4x8x1xf32, #tpu.memory_space<vmem>>, vector<1x8x1xf32>,
    %c1_58 = arith.constant 1 : index
    %c0_59 = arith.constant 0 : index
    %c0_60 = arith.constant 0 : index
    %82 = vector.load %arg8[%c1_58, %c0_59, %c0_60] : memref<4x8x32xf32, #tpu.memory_space<vmem>>, vector<1x8x32xf32>
    %83 = vector.shape_cast %82 : vector<1x8x32xf32> to vector<8x32xf32>
    %cst_61 = arith.constant dense<0.000000e+00> : vector<8x32xf32>
    %84 = tpu.matmul %73, %52, %cst_61 {dimension_numbers = #tpu.dot_dimension_numbers<[1], [0], [0], [1], [0, 0, 1, 1], [], []>} : vector<8x8xf32>, vector<8x32xf32>, vector<8x32xf32> -> vector<8x32xf32>
    %85 = arith.addf %83, %84 : vector<8x32xf32>
    %c1_62 = arith.constant 1 : index
    %c0_63 = arith.constant 0 : index
    %c0_64 = arith.constant 0 : index
    %86 = vector.load %arg8[%c1_62, %c0_63, %c0_64] : memref<4x8x32xf32, #tpu.memory_space<vmem>>, vector<1x8x32xf32>
    %87 = vector.shape_cast %86 : vector<1x8x32xf32> to vector<8x32xf32>
    %88 = vector.shape_cast %85 : vector<8x32xf32> to vector<1x8x32xf32>
    tpu.vector_store %arg8[%c1_62, %c0_63, %c0_64], %88 {strides = array<i32>} : memref<4x8x32xf32, #tpu.memory_space<vmem>>, vector<1x8x32xf32>,
    %c0_65 = arith.constant 0 : index
    %c2 = arith.constant 2 : index
    %c0_66 = arith.constant 0 : index
    %c0_67 = arith.constant 0 : index
    %89 = vector.load %arg3[%c0_65, %c2, %c0_66, %c0_67] : memref<1x4x8x32xf32, #tpu.memory_space<vmem>>, vector<1x1x8x32xf32>
    %90 = vector.shape_cast %89 : vector<1x1x8x32xf32> to vector<8x32xf32>
    %c0_68 = arith.constant 0 : index
    %c2_69 = arith.constant 2 : index
    %c0_70 = arith.constant 0 : index
    %c0_71 = arith.constant 0 : index
    %91 = vector.load %arg4[%c0_68, %c2_69, %c0_70, %c0_71] : memref<1x4x8x32xf32, #tpu.memory_space<vmem>>, vector<1x1x8x32xf32>
    %92 = vector.shape_cast %91 : vector<1x1x8x32xf32> to vector<8x32xf32>
    %c0_72 = arith.constant 0 : index
    %c0_73 = arith.constant 0 : index
    %c2_74 = arith.constant 2 : index
    %c0_75 = arith.constant 0 : index
    %93 = vector.load %arg5[%c0_72, %c0_73, %c2_74, %c0_75] : memref<1x8x4x32xf32, #tpu.memory_space<vmem>>, vector<1x8x1x32xf32>
    %94 = vector.shape_cast %93 : vector<1x8x1x32xf32> to vector<8x32xf32>
    %cst_76 = arith.constant dense<0.000000e+00> : vector<8x8xf32>
    %95 = tpu.matmul %90, %92, %cst_76 {dimension_numbers = #tpu.dot_dimension_numbers<[1], [1], [0], [0], [0, 0, 1, 0], [], []>} : vector<8x32xf32>, vector<8x32xf32>, vector<8x8xf32> -> vector<8x8xf32>
    %96 = arith.mulf %90, %90 : vector<8x32xf32>
    %cst_77 = arith.constant dense<0.000000e+00> : vector<8xf32>
    %97 = vector.multi_reduction <add>, %96, %cst_77 [1] : vector<8x32xf32> to vector<8xf32>
    %98 = vector.shape_cast %97 : vector<8xf32> to vector<8x1xf32>
    %99 = arith.mulf %92, %92 : vector<8x32xf32>
    %cst_78 = arith.constant dense<0.000000e+00> : vector<8xf32>
    %100 = vector.multi_reduction <add>, %99, %cst_78 [1] : vector<8x32xf32> to vector<8xf32>
    %101 = vector.shape_cast %100 : vector<8xf32> to vector<8x1xf32>
    %102 = tpu.transpose %101, [1, 0] : vector<8x1xf32> -> vector<1x8xf32>
    %103 = vector.broadcast %98 : vector<8x1xf32> to vector<8x8xf32>
    %104 = vector.broadcast %102 : vector<1x8xf32> to vector<8x8xf32>
    %105 = arith.addf %103, %104 : vector<8x8xf32>
    %cst_79 = arith.constant 2.000000e+00 : f32
    %106 = vector.broadcast %cst_79 : f32 to vector<8x8xf32>
    %107 = arith.mulf %106, %95 : vector<8x8xf32>
    %108 = arith.subf %105, %107 : vector<8x8xf32>
    %cst_80 = arith.constant 0.000000e+00 : f32
    %109 = vector.broadcast %cst_80 : f32 to vector<8x8xf32>
    %110 = arith.maximumf %108, %109 : vector<8x8xf32>
    %cst_81 = arith.constant -0.0883883461 : f32
    %111 = vector.broadcast %cst_81 : f32 to vector<8x8xf32>
    %112 = arith.mulf %110, %111 : vector<8x8xf32>
    %113 = math.exp %112 : vector<8x8xf32>
    %114 = vector.broadcast %4 : vector<1x8xf32> to vector<8x8xf32>
    %115 = arith.mulf %113, %114 : vector<8x8xf32>
    %c2_82 = arith.constant 2 : index
    %c0_83 = arith.constant 0 : index
    %c0_84 = arith.constant 0 : index
    %116 = vector.load %arg9[%c2_82, %c0_83, %c0_84] : memref<4x8x1xf32, #tpu.memory_space<vmem>>, vector<1x8x1xf32>
    %117 = vector.shape_cast %116 : vector<1x8x1xf32> to vector<8x1xf32>
    %cst_85 = arith.constant dense<0.000000e+00> : vector<8xf32>
    %118 = vector.multi_reduction <add>, %115, %cst_85 [1] : vector<8x8xf32> to vector<8xf32>
    %119 = vector.shape_cast %118 : vector<8xf32> to vector<8x1xf32>
    %120 = arith.addf %117, %119 : vector<8x1xf32>
    %c2_86 = arith.constant 2 : index
    %c0_87 = arith.constant 0 : index
    %c0_88 = arith.constant 0 : index
    %121 = vector.load %arg9[%c2_86, %c0_87, %c0_88] : memref<4x8x1xf32, #tpu.memory_space<vmem>>, vector<1x8x1xf32>
    %122 = vector.shape_cast %121 : vector<1x8x1xf32> to vector<8x1xf32>
    %123 = vector.shape_cast %120 : vector<8x1xf32> to vector<1x8x1xf32>
    tpu.vector_store %arg9[%c2_86, %c0_87, %c0_88], %123 {strides = array<i32>} : memref<4x8x1xf32, #tpu.memory_space<vmem>>, vector<1x8x1xf32>,
    %c2_89 = arith.constant 2 : index
    %c0_90 = arith.constant 0 : index
    %c0_91 = arith.constant 0 : index
    %124 = vector.load %arg8[%c2_89, %c0_90, %c0_91] : memref<4x8x32xf32, #tpu.memory_space<vmem>>, vector<1x8x32xf32>
    %125 = vector.shape_cast %124 : vector<1x8x32xf32> to vector<8x32xf32>
    %cst_92 = arith.constant dense<0.000000e+00> : vector<8x32xf32>
    %126 = tpu.matmul %115, %94, %cst_92 {dimension_numbers = #tpu.dot_dimension_numbers<[1], [0], [0], [1], [0, 0, 1, 1], [], []>} : vector<8x8xf32>, vector<8x32xf32>, vector<8x32xf32> -> vector<8x32xf32>
    %127 = arith.addf %125, %126 : vector<8x32xf32>
    %c2_93 = arith.constant 2 : index
    %c0_94 = arith.constant 0 : index
    %c0_95 = arith.constant 0 : index
    %128 = vector.load %arg8[%c2_93, %c0_94, %c0_95] : memref<4x8x32xf32, #tpu.memory_space<vmem>>, vector<1x8x32xf32>
    %129 = vector.shape_cast %128 : vector<1x8x32xf32> to vector<8x32xf32>
    %130 = vector.shape_cast %127 : vector<8x32xf32> to vector<1x8x32xf32>
    tpu.vector_store %arg8[%c2_93, %c0_94, %c0_95], %130 {strides = array<i32>} : memref<4x8x32xf32, #tpu.memory_space<vmem>>, vector<1x8x32xf32>,
    %c0_96 = arith.constant 0 : index
    %c3 = arith.constant 3 : index
    %c0_97 = arith.constant 0 : index
    %c0_98 = arith.constant 0 : index
    %131 = vector.load %arg3[%c0_96, %c3, %c0_97, %c0_98] : memref<1x4x8x32xf32, #tpu.memory_space<vmem>>, vector<1x1x8x32xf32>
    %132 = vector.shape_cast %131 : vector<1x1x8x32xf32> to vector<8x32xf32>
    %c0_99 = arith.constant 0 : index
    %c3_100 = arith.constant 3 : index
    %c0_101 = arith.constant 0 : index
    %c0_102 = arith.constant 0 : index
    %133 = vector.load %arg4[%c0_99, %c3_100, %c0_101, %c0_102] : memref<1x4x8x32xf32, #tpu.memory_space<vmem>>, vector<1x1x8x32xf32>
    %134 = vector.shape_cast %133 : vector<1x1x8x32xf32> to vector<8x32xf32>
    %c0_103 = arith.constant 0 : index
    %c0_104 = arith.constant 0 : index
    %c3_105 = arith.constant 3 : index
    %c0_106 = arith.constant 0 : index
    %135 = vector.load %arg5[%c0_103, %c0_104, %c3_105, %c0_106] : memref<1x8x4x32xf32, #tpu.memory_space<vmem>>, vector<1x8x1x32xf32>
    %136 = vector.shape_cast %135 : vector<1x8x1x32xf32> to vector<8x32xf32>
    %cst_107 = arith.constant dense<0.000000e+00> : vector<8x8xf32>
    %137 = tpu.matmul %132, %134, %cst_107 {dimension_numbers = #tpu.dot_dimension_numbers<[1], [1], [0], [0], [0, 0, 1, 0], [], []>} : vector<8x32xf32>, vector<8x32xf32>, vector<8x8xf32> -> vector<8x8xf32>
    %138 = arith.mulf %132, %132 : vector<8x32xf32>
    %cst_108 = arith.constant dense<0.000000e+00> : vector<8xf32>
    %139 = vector.multi_reduction <add>, %138, %cst_108 [1] : vector<8x32xf32> to vector<8xf32>
    %140 = vector.shape_cast %139 : vector<8xf32> to vector<8x1xf32>
    %141 = arith.mulf %134, %134 : vector<8x32xf32>
    %cst_109 = arith.constant dense<0.000000e+00> : vector<8xf32>
    %142 = vector.multi_reduction <add>, %141, %cst_109 [1] : vector<8x32xf32> to vector<8xf32>
    %143 = vector.shape_cast %142 : vector<8xf32> to vector<8x1xf32>
    %144 = tpu.transpose %143, [1, 0] : vector<8x1xf32> -> vector<1x8xf32>
    %145 = vector.broadcast %140 : vector<8x1xf32> to vector<8x8xf32>
    %146 = vector.broadcast %144 : vector<1x8xf32> to vector<8x8xf32>
    %147 = arith.addf %145, %146 : vector<8x8xf32>
    %cst_110 = arith.constant 2.000000e+00 : f32
    %148 = vector.broadcast %cst_110 : f32 to vector<8x8xf32>
    %149 = arith.mulf %148, %137 : vector<8x8xf32>
    %150 = arith.subf %147, %149 : vector<8x8xf32>
    %cst_111 = arith.constant 0.000000e+00 : f32
    %151 = vector.broadcast %cst_111 : f32 to vector<8x8xf32>
    %152 = arith.maximumf %150, %151 : vector<8x8xf32>
    %cst_112 = arith.constant -0.0883883461 : f32
    %153 = vector.broadcast %cst_112 : f32 to vector<8x8xf32>
    %154 = arith.mulf %152, %153 : vector<8x8xf32>
    %155 = math.exp %154 : vector<8x8xf32>
    %156 = vector.broadcast %4 : vector<1x8xf32> to vector<8x8xf32>
    %157 = arith.mulf %155, %156 : vector<8x8xf32>
    %c3_113 = arith.constant 3 : index
    %c0_114 = arith.constant 0 : index
    %c0_115 = arith.constant 0 : index
    %158 = vector.load %arg9[%c3_113, %c0_114, %c0_115] : memref<4x8x1xf32, #tpu.memory_space<vmem>>, vector<1x8x1xf32>
    %159 = vector.shape_cast %158 : vector<1x8x1xf32> to vector<8x1xf32>
    %cst_116 = arith.constant dense<0.000000e+00> : vector<8xf32>
    %160 = vector.multi_reduction <add>, %157, %cst_116 [1] : vector<8x8xf32> to vector<8xf32>
    %161 = vector.shape_cast %160 : vector<8xf32> to vector<8x1xf32>
    %162 = arith.addf %159, %161 : vector<8x1xf32>
    %c3_117 = arith.constant 3 : index
    %c0_118 = arith.constant 0 : index
    %c0_119 = arith.constant 0 : index
    %163 = vector.load %arg9[%c3_117, %c0_118, %c0_119] : memref<4x8x1xf32, #tpu.memory_space<vmem>>, vector<1x8x1xf32>
    %164 = vector.shape_cast %163 : vector<1x8x1xf32> to vector<8x1xf32>
    %165 = vector.shape_cast %162 : vector<8x1xf32> to vector<1x8x1xf32>
    tpu.vector_store %arg9[%c3_117, %c0_118, %c0_119], %165 {strides = array<i32>} : memref<4x8x1xf32, #tpu.memory_space<vmem>>, vector<1x8x1xf32>,
    %c3_120 = arith.constant 3 : index
    %c0_121 = arith.constant 0 : index
    %c0_122 = arith.constant 0 : index
    %166 = vector.load %arg8[%c3_120, %c0_121, %c0_122] : memref<4x8x32xf32, #tpu.memory_space<vmem>>, vector<1x8x32xf32>
    %167 = vector.shape_cast %166 : vector<1x8x32xf32> to vector<8x32xf32>
    %cst_123 = arith.constant dense<0.000000e+00> : vector<8x32xf32>
    %168 = tpu.matmul %157, %136, %cst_123 {dimension_numbers = #tpu.dot_dimension_numbers<[1], [0], [0], [1], [0, 0, 1, 1], [], []>} : vector<8x8xf32>, vector<8x32xf32>, vector<8x32xf32> -> vector<8x32xf32>
    %169 = arith.addf %167, %168 : vector<8x32xf32>
    %c3_124 = arith.constant 3 : index
    %c0_125 = arith.constant 0 : index
    %c0_126 = arith.constant 0 : index
    %170 = vector.load %arg8[%c3_124, %c0_125, %c0_126] : memref<4x8x32xf32, #tpu.memory_space<vmem>>, vector<1x8x32xf32>
    %171 = vector.shape_cast %170 : vector<1x8x32xf32> to vector<8x32xf32>
    %172 = vector.shape_cast %169 : vector<8x32xf32> to vector<1x8x32xf32>
    tpu.vector_store %arg8[%c3_124, %c0_125, %c0_126], %172 {strides = array<i32>} : memref<4x8x32xf32, #tpu.memory_space<vmem>>, vector<1x8x32xf32>,
    %c0_i32_127 = arith.constant 0 : i32
    %173 = arith.cmpi eq, %arg2, %c0_i32_127 : i32
    %174 = arith.extui %173 : i1 to i32
    %c0_i32_128 = arith.constant 0 : i32
    %175 = arith.cmpi ne, %174, %c0_i32_128 : i32
    scf.if %175 {
      %c0_129 = arith.constant 0 : index
      %c0_130 = arith.constant 0 : index
      %c0_131 = arith.constant 0 : index
      %176 = vector.load %arg9[%c0_129, %c0_130, %c0_131] : memref<4x8x1xf32, #tpu.memory_space<vmem>>, vector<1x8x1xf32>
      %177 = vector.shape_cast %176 : vector<1x8x1xf32> to vector<8x1xf32>
      %cst_132 = arith.constant 9.99999997E-7 : f32
      %178 = vector.broadcast %cst_132 : f32 to vector<8x1xf32>
      %179 = arith.addf %177, %178 : vector<8x1xf32>
      %180 = tpu.reciprocal %179 {approx = true} : vector<8x1xf32> -> vector<8x1xf32>
      %c0_133 = arith.constant 0 : index
      %c0_134 = arith.constant 0 : index
      %c0_135 = arith.constant 0 : index
      %181 = vector.load %arg8[%c0_133, %c0_134, %c0_135] : memref<4x8x32xf32, #tpu.memory_space<vmem>>, vector<1x8x32xf32>
      %182 = vector.shape_cast %181 : vector<1x8x32xf32> to vector<8x32xf32>
      %183 = vector.broadcast %180 : vector<8x1xf32> to vector<8x32xf32>
      %184 = arith.mulf %182, %183 : vector<8x32xf32>
      %c0_136 = arith.constant 0 : index
      %c0_137 = arith.constant 0 : index
      %c0_138 = arith.constant 0 : index
      %c0_139 = arith.constant 0 : index
      %185 = vector.load %arg7[%c0_136, %c0_137, %c0_138, %c0_139] : memref<1x8x4x32xf32, #tpu.memory_space<vmem>>, vector<1x8x1x32xf32>
      %186 = vector.shape_cast %185 : vector<1x8x1x32xf32> to vector<8x32xf32>
      %187 = vector.shape_cast %184 : vector<8x32xf32> to vector<1x8x1x32xf32>
      tpu.vector_store %arg7[%c0_136, %c0_137, %c0_138, %c0_139], %187 {strides = array<i32>} : memref<1x8x4x32xf32, #tpu.memory_space<vmem>>, vector<1x8x1x32xf32>,
      %c1_140 = arith.constant 1 : index
      %c0_141 = arith.constant 0 : index
      %c0_142 = arith.constant 0 : index
      %188 = vector.load %arg9[%c1_140, %c0_141, %c0_142] : memref<4x8x1xf32, #tpu.memory_space<vmem>>, vector<1x8x1xf32>
      %189 = vector.shape_cast %188 : vector<1x8x1xf32> to vector<8x1xf32>
      %cst_143 = arith.constant 9.99999997E-7 : f32
      %190 = vector.broadcast %cst_143 : f32 to vector<8x1xf32>
      %191 = arith.addf %189, %190 : vector<8x1xf32>
      %192 = tpu.reciprocal %191 {approx = true} : vector<8x1xf32> -> vector<8x1xf32>
      %c1_144 = arith.constant 1 : index
      %c0_145 = arith.constant 0 : index
      %c0_146 = arith.constant 0 : index
      %193 = vector.load %arg8[%c1_144, %c0_145, %c0_146] : memref<4x8x32xf32, #tpu.memory_space<vmem>>, vector<1x8x32xf32>
      %194 = vector.shape_cast %193 : vector<1x8x32xf32> to vector<8x32xf32>
      %195 = vector.broadcast %192 : vector<8x1xf32> to vector<8x32xf32>
      %196 = arith.mulf %194, %195 : vector<8x32xf32>
      %c0_147 = arith.constant 0 : index
      %c0_148 = arith.constant 0 : index
      %c1_149 = arith.constant 1 : index
      %c0_150 = arith.constant 0 : index
      %197 = vector.load %arg7[%c0_147, %c0_148, %c1_149, %c0_150] : memref<1x8x4x32xf32, #tpu.memory_space<vmem>>, vector<1x8x1x32xf32>
      %198 = vector.shape_cast %197 : vector<1x8x1x32xf32> to vector<8x32xf32>
      %199 = vector.shape_cast %196 : vector<8x32xf32> to vector<1x8x1x32xf32>
      tpu.vector_store %arg7[%c0_147, %c0_148, %c1_149, %c0_150], %199 {strides = array<i32>} : memref<1x8x4x32xf32, #tpu.memory_space<vmem>>, vector<1x8x1x32xf32>,
      %c2_151 = arith.constant 2 : index
      %c0_152 = arith.constant 0 : index
      %c0_153 = arith.constant 0 : index
      %200 = vector.load %arg9[%c2_151, %c0_152, %c0_153] : memref<4x8x1xf32, #tpu.memory_space<vmem>>, vector<1x8x1xf32>
      %201 = vector.shape_cast %200 : vector<1x8x1xf32> to vector<8x1xf32>
      %cst_154 = arith.constant 9.99999997E-7 : f32
      %202 = vector.broadcast %cst_154 : f32 to vector<8x1xf32>
      %203 = arith.addf %201, %202 : vector<8x1xf32>
      %204 = tpu.reciprocal %203 {approx = true} : vector<8x1xf32> -> vector<8x1xf32>
      %c2_155 = arith.constant 2 : index
      %c0_156 = arith.constant 0 : index
      %c0_157 = arith.constant 0 : index
      %205 = vector.load %arg8[%c2_155, %c0_156, %c0_157] : memref<4x8x32xf32, #tpu.memory_space<vmem>>, vector<1x8x32xf32>
      %206 = vector.shape_cast %205 : vector<1x8x32xf32> to vector<8x32xf32>
      %207 = vector.broadcast %204 : vector<8x1xf32> to vector<8x32xf32>
      %208 = arith.mulf %206, %207 : vector<8x32xf32>
      %c0_158 = arith.constant 0 : index
      %c0_159 = arith.constant 0 : index
      %c2_160 = arith.constant 2 : index
      %c0_161 = arith.constant 0 : index
      %209 = vector.load %arg7[%c0_158, %c0_159, %c2_160, %c0_161] : memref<1x8x4x32xf32, #tpu.memory_space<vmem>>, vector<1x8x1x32xf32>
      %210 = vector.shape_cast %209 : vector<1x8x1x32xf32> to vector<8x32xf32>
      %211 = vector.shape_cast %208 : vector<8x32xf32> to vector<1x8x1x32xf32>
      tpu.vector_store %arg7[%c0_158, %c0_159, %c2_160, %c0_161], %211 {strides = array<i32>} : memref<1x8x4x32xf32, #tpu.memory_space<vmem>>, vector<1x8x1x32xf32>,
      %c3_162 = arith.constant 3 : index
      %c0_163 = arith.constant 0 : index
      %c0_164 = arith.constant 0 : index
      %212 = vector.load %arg9[%c3_162, %c0_163, %c0_164] : memref<4x8x1xf32, #tpu.memory_space<vmem>>, vector<1x8x1xf32>
      %213 = vector.shape_cast %212 : vector<1x8x1xf32> to vector<8x1xf32>
      %cst_165 = arith.constant 9.99999997E-7 : f32
      %214 = vector.broadcast %cst_165 : f32 to vector<8x1xf32>
      %215 = arith.addf %213, %214 : vector<8x1xf32>
      %216 = tpu.reciprocal %215 {approx = true} : vector<8x1xf32> -> vector<8x1xf32>
      %c3_166 = arith.constant 3 : index
      %c0_167 = arith.constant 0 : index
      %c0_168 = arith.constant 0 : index
      %217 = vector.load %arg8[%c3_166, %c0_167, %c0_168] : memref<4x8x32xf32, #tpu.memory_space<vmem>>, vector<1x8x32xf32>
      %218 = vector.shape_cast %217 : vector<1x8x32xf32> to vector<8x32xf32>
      %219 = vector.broadcast %216 : vector<8x1xf32> to vector<8x32xf32>
      %220 = arith.mulf %218, %219 : vector<8x32xf32>
      %c0_169 = arith.constant 0 : index
      %c0_170 = arith.constant 0 : index
      %c3_171 = arith.constant 3 : index
      %c0_172 = arith.constant 0 : index
      %221 = vector.load %arg7[%c0_169, %c0_170, %c3_171, %c0_172] : memref<1x8x4x32xf32, #tpu.memory_space<vmem>>, vector<1x8x1x32xf32>
      %222 = vector.shape_cast %221 : vector<1x8x1x32xf32> to vector<8x32xf32>
      %223 = vector.shape_cast %220 : vector<8x32xf32> to vector<1x8x1x32xf32>
      tpu.vector_store %arg7[%c0_169, %c0_170, %c3_171, %c0_172], %223 {strides = array<i32>} : memref<1x8x4x32xf32, #tpu.memory_space<vmem>>, vector<1x8x1x32xf32>,
    } else {
    }
    return
  }
  func.func @transform_0(%arg0: i32, %arg1: i32, %arg2: i32) -> (i32, i32, i32, i32) {
    %c0_i32 = arith.constant 0 : i32
    %c0_i32_0 = arith.constant 0 : i32
    %c0_i32_1 = arith.constant 0 : i32
    return %arg0, %c0_i32, %arg1, %c0_i32_0 : i32, i32, i32, i32
  }
  func.func @transform_1(%arg0: i32, %arg1: i32, %arg2: i32) -> (i32, i32, i32, i32) {
    %c0_i32 = arith.constant 0 : i32
    %c0_i32_0 = arith.constant 0 : i32
    %c0_i32_1 = arith.constant 0 : i32
    return %arg0, %c0_i32, %arg2, %c0_i32_0 : i32, i32, i32, i32
  }
  func.func @transform_2(%arg0: i32, %arg1: i32, %arg2: i32) -> (i32, i32, i32, i32) {
    %c0_i32 = arith.constant 0 : i32
    %c0_i32_0 = arith.constant 0 : i32
    %c0_i32_1 = arith.constant 0 : i32
    return %arg0, %arg2, %c0_i32, %c0_i32_0 : i32, i32, i32, i32
  }
  func.func @transform_3(%arg0: i32, %arg1: i32, %arg2: i32) -> (i32, i32, i32) {
    %c0_i32 = arith.constant 0 : i32
    %c0_i32_0 = arith.constant 0 : i32
    return %arg0, %c0_i32, %arg2 : i32, i32, i32
  }
  func.func @transform_4(%arg0: i32, %arg1: i32, %arg2: i32) -> (i32, i32, i32, i32) {
    %c0_i32 = arith.constant 0 : i32
    %c0_i32_0 = arith.constant 0 : i32
    %c0_i32_1 = arith.constant 0 : i32
    return %arg0, %arg1, %c0_i32, %c0_i32_0 : i32, i32, i32, i32
  }
}

</mosaic_0001>

<llo_original>
// kernel: tpu_custom_call.1
$region0: #{tpu_custom_call.1}
  #allocation0 [shape = 'u32[]', space=smem, size = 0x4, offset = 0x4, fixed_abs, tag = 'smem constant byte address 0x4 - core index']
  #allocation1 [shape = 'u32[144,128]{1,0:T(1,128)}', space=vmem, size = 0x12000, scoped, tag = 'internal scratch']
  #allocation2 [shape = 'f32[4,8,32]{2,1,0:T(8,128)}', space=vmem, size = 0x4000, scoped, tag = 'scratch operand']
  #allocation3 [shape = 'f32[4,8,1]{2,1,0:T(8,128)}', space=vmem, size = 0x4000, scoped, tag = 'scratch operand']
  %s0 = inlined_call_operand.hbm [shape: f32[2,4,8,32], index: 0, kind: input, shape index: {}]
  %s1 = inlined_call_operand.hbm [shape: f32[2,4,8,32], index: 1, kind: input, shape index: {}]
  %s2 = inlined_call_operand.hbm [shape: f32[2,8,4,32], index: 2, kind: input, shape index: {}]
  %s3 = inlined_call_operand.vmem [shape: f32[2,1,8], index: 3, kind: input, shape index: {}]
  %s4 = inlined_call_operand.hbm [shape: f32[2,8,4,32], index: 4, kind: output, shape index: {}]
  %s5 = sld [smem:[#allocation0]]
  $region69: #{tpu_custom_call.1} parent=0
    _
  %s7 = ssub.s32 1, %s5
  %s8 = scalar_select 0, %s7, %s5
  $region1: #{tpu_custom_call.1} parent=0
    #allocation4 [shape = 'u8[32768]{0}', space=vmem, size = 0x8000, scoped, tag = 'input window, operand 0']
    #allocation5 [shape = 's32[2]{0}', space=sflag, size = 0x8, scoped, tag = 'scoped memory for tpu_custom_call.1']
    #allocation6 [shape = 's32[2]{0}', space=sflag, size = 0x8, scoped, tag = 'scoped memory for tpu_custom_call.1']
    #allocation7 [shape = 'u8[32768]{0}', space=vmem, size = 0x8000, scoped, tag = 'input window, operand 1']
    #allocation8 [shape = 's32[2]{0}', space=sflag, size = 0x8, scoped, tag = 'scoped memory for tpu_custom_call.1']
    #allocation9 [shape = 'u8[32768]{0}', space=vmem, size = 0x8000, scoped, tag = 'input window, operand 2']
    #allocation10 [shape = 'u8[32768]{0}', space=vmem, size = 0x8000, scoped, tag = 'output window, operand 0']
    %9 = vsyncpa [#allocation5], 0
    %s10 = scalar_lea.sflag [#allocation5], 1
    %11 = vsyncpa %s10, 0
    %12 = vsyncpa [#allocation8], 0
    %s13 = scalar_lea.sflag [#allocation8], 1
    %14 = vsyncpa %s13, 0
    %15 = vsyncpa [#allocation6], 0
    %s16 = scalar_lea.sflag [#allocation6], 1
    %17 = vsyncpa %s16, 0
    loop: start=0, step=1, limit=4
    $region2: #{tpu_custom_call.1} parent=1 // loop_pre_header
      _
    $region3: #{tpu_custom_call.1} parent=1 // loop_header
      %s19 = sphi 0, %s23
      %p20 = scmp.ge.s32.totalorder %s19, 4
      %s26 = sphi 0, %s45
      %s27 = sphi 0, %s41
      %s28 = sphi 0, %s37
      %s29 = sphi 0, %s26
      %s30 = sphi 0, %s27
      %s31 = sphi 0, %s28
      %s32 = sphi 0, %s29
      %s33 = sphi 0, %s30
      %s34 = sphi 0, %s31
      %s50 = sphi 0, %s52
      %s53 = sphi 0, %s50
      %s54 = sphi 0, %s53
      %s70 = sphi 0, %s54
      %s78 = sphi 0, %s80
      %s81 = sphi 0, %s78
      %s82 = sphi 0, %s81
      %s98 = sphi 0, %s82
      %s106 = sphi 0, %s108
      %s109 = sphi 0, %s106
      %s110 = sphi 0, %s109
      %s126 = sphi 0, %s110
      %s134 = sphi 0, %s136
      %s137 = sphi 0, %s134
      %s138 = sphi 0, %s137
      %s154 = sphi 0, %s138
      %s162 = sphi 0, %s164
      %s165 = sphi 0, %s162
      %s166 = sphi 0, %s165
      %s182 = sphi 0, %s166
    $region4: #{tpu_custom_call.1} parent=1 // loop_header_branch
      %22 = sbr.rel (%p20) target = $region8
    $region5: #{tpu_custom_call.1} parent=1 // loop_body
      %s24 = ssub.s32 %s19, 1
      %s25 = ssub.s32 %s19, 2
      %s35 = sadd.s32 1, %s28
      %p36 = scmp.ge.s32.totalorder %s35, 1
      %s37 = scalar_select %p36, 0, %s35
      %s38 = sadd.s32 1, %s27
      %s39 = scalar_select %p36, %s38, %s27
      %p40 = scmp.ge.s32.totalorder %s39, 1
      %s41 = scalar_select %p40, 0, %s39
      %s42 = sadd.s32 1, %s26
      %s43 = scalar_select %p40, %s42, %s26
      %p44 = scmp.ge.s32.totalorder %s43, 2
      %s45 = scalar_select %p44, 0, %s43
      %s46 = ssub.s32 %s26, %s45
      %s47 = ssub.s32 %s27, %s41
      %s48 = sor.u32 %s46, %s47
      %p49 = scmp.eq.s32.totalorder %s48, 0
      %s51 = sadd.s32 %s50, 1
      %s52 = scalar_select %p49, %s50, %s51
      %p55 = pneg %p49
      %p56 = scmp.eq.s32.totalorder %s19, 1
      %p57 = por %p55, %p56
      %p58 = scmp.ne.s32.totalorder %s50, %s53
      %p59 = scmp.eq.s32.totalorder %s19, 0
      %p60 = por %p58, %p59
      %p61 = scmp.ne.s32.totalorder %s50, %s53
      %p62 = scmp.eq.s32.totalorder %s24, 1
      %p63 = por %p61, %p62
      %p64 = scmp.ne.s32.totalorder %s53, %s54
      %p65 = scmp.eq.s32.totalorder %s24, 0
      %p66 = por %p64, %p65
      %p67 = scmp.ne.s32.totalorder %s53, %s54
      %p68 = scmp.eq.s32.totalorder %s25, 1
      %p69 = por %p67, %p68
      %p71 = scmp.ne.s32.totalorder %s54, %s70
      %p72 = scmp.eq.s32.totalorder %s25, 0
      %p73 = por %p71, %p72
      %s74 = ssub.s32 %s26, %s45
      %s75 = ssub.s32 %s28, %s37
      %s76 = sor.u32 %s74, %s75
      %p77 = scmp.eq.s32.totalorder %s76, 0
      %s79 = sadd.s32 %s78, 1
      %s80 = scalar_select %p77, %s78, %s79
      %p83 = pneg %p77
      %p84 = scmp.eq.s32.totalorder %s19, 1
      %p85 = por %p83, %p84
      %p86 = scmp.ne.s32.totalorder %s78, %s81
      %p87 = scmp.eq.s32.totalorder %s19, 0
      %p88 = por %p86, %p87
      %p89 = scmp.ne.s32.totalorder %s78, %s81
      %p90 = scmp.eq.s32.totalorder %s24, 1
      %p91 = por %p89, %p90
      %p92 = scmp.ne.s32.totalorder %s81, %s82
      %p93 = scmp.eq.s32.totalorder %s24, 0
      %p94 = por %p92, %p93
      %p95 = scmp.ne.s32.totalorder %s81, %s82
      %p96 = scmp.eq.s32.totalorder %s25, 1
      %p97 = por %p95, %p96
      %p99 = scmp.ne.s32.totalorder %s82, %s98
      %p100 = scmp.eq.s32.totalorder %s25, 0
      %p101 = por %p99, %p100
      %s102 = ssub.s32 %s26, %s45
      %s103 = ssub.s32 %s28, %s37
      %s104 = sor.u32 %s102, %s103
      %p105 = scmp.eq.s32.totalorder %s104, 0
      %s107 = sadd.s32 %s106, 1
      %s108 = scalar_select %p105, %s106, %s107
      %p111 = pneg %p105
      %p112 = scmp.eq.s32.totalorder %s19, 1
      %p113 = por %p111, %p112
      %p114 = scmp.ne.s32.totalorder %s106, %s109
      %p115 = scmp.eq.s32.totalorder %s19, 0
      %p116 = por %p114, %p115
      %p117 = scmp.ne.s32.totalorder %s106, %s109
      %p118 = scmp.eq.s32.totalorder %s24, 1
      %p119 = por %p117, %p118
      %p120 = scmp.ne.s32.totalorder %s109, %s110
      %p121 = scmp.eq.s32.totalorder %s24, 0
      %p122 = por %p120, %p121
      %p123 = scmp.ne.s32.totalorder %s109, %s110
      %p124 = scmp.eq.s32.totalorder %s25, 1
      %p125 = por %p123, %p124
      %p127 = scmp.ne.s32.totalorder %s110, %s126
      %p128 = scmp.eq.s32.totalorder %s25, 0
      %p129 = por %p127, %p128
      %s130 = ssub.s32 %s26, %s45
      %s131 = ssub.s32 %s28, %s37
      %s132 = sor.u32 %s130, %s131
      %p133 = scmp.eq.s32.totalorder %s132, 0
      %s135 = sadd.s32 %s134, 1
      %s136 = scalar_select %p133, %s134, %s135
      %p139 = pneg %p133
      %p140 = scmp.eq.s32.totalorder %s19, 1
      %p141 = por %p139, %p140
      %p142 = scmp.ne.s32.totalorder %s134, %s137
      %p143 = scmp.eq.s32.totalorder %s19, 0
      %p144 = por %p142, %p143
      %p145 = scmp.ne.s32.totalorder %s134, %s137
      %p146 = scmp.eq.s32.totalorder %s24, 1
      %p147 = por %p145, %p146
      %p148 = scmp.ne.s32.totalorder %s137, %s138
      %p149 = scmp.eq.s32.totalorder %s24, 0
      %p150 = por %p148, %p149
      %p151 = scmp.ne.s32.totalorder %s137, %s138
      %p152 = scmp.eq.s32.totalorder %s25, 1
      %p153 = por %p151, %p152
      %p155 = scmp.ne.s32.totalorder %s138, %s154
      %p156 = scmp.eq.s32.totalorder %s25, 0
      %p157 = por %p155, %p156
      %s158 = ssub.s32 %s26, %s45
      %s159 = ssub.s32 %s27, %s41
      %s160 = sor.u32 %s158, %s159
      %p161 = scmp.eq.s32.totalorder %s160, 0
      %s163 = sadd.s32 %s162, 1
      %s164 = scalar_select %p161, %s162, %s163
      %p167 = pneg %p161
      %p168 = scmp.eq.s32.totalorder %s19, 1
      %p169 = por %p167, %p168
      %p170 = scmp.ne.s32.totalorder %s162, %s165
      %p171 = scmp.eq.s32.totalorder %s19, 0
      %p172 = por %p170, %p171
      %p173 = scmp.ne.s32.totalorder %s162, %s165
      %p174 = scmp.eq.s32.totalorder %s24, 1
      %p175 = por %p173, %p174
      %p176 = scmp.ne.s32.totalorder %s165, %s166
      %p177 = scmp.eq.s32.totalorder %s24, 0
      %p178 = por %p176, %p177
      %p179 = scmp.ne.s32.totalorder %s165, %s166
      %p180 = scmp.eq.s32.totalorder %s25, 1
      %p181 = por %p179, %p180
      %p183 = scmp.ne.s32.totalorder %s166, %s182
      %p184 = scmp.eq.s32.totalorder %s25, 0
      %p185 = por %p183, %p184
      %p186 = scmp.le.s32.totalorder 1, %s19
      %p187 = scmp.lt.s32.totalorder %s19, 3
      %p188 = pnand %p186, %p187
      %p189 = pneg %p188
      // Predicated region
      $region9: #{tpu_custom_call.1} parent=5 // pred_check
        _
      $region10: #{tpu_custom_call.1} parent=5 // pred_check_branch
        %191 = sbr.rel (%p188) target = $region12
      $region11: #{tpu_custom_call.1} parent=5 // pred_region
        %s192 = ssub.s32 %s19, 1
      $region12: #{tpu_custom_call.1} parent=5 // pred_fallthru
        _
      %p193 = scmp.lt.s32.totalorder %s19, 2
      // Predicated region
      $region13: #{tpu_custom_call.1} parent=5 // pred_check
        %p194 = pneg %p193
      $region14: #{tpu_custom_call.1} parent=5 // pred_check_branch
        %196 = sbr.rel (%p194) target = $region16
      $region15: #{tpu_custom_call.1} parent=5 // pred_region
        // Predicated region
        $region17: #{tpu_custom_call.1} parent=15 // pred_check
          %p197 = pneg %p60
        $region18: #{tpu_custom_call.1} parent=15 // pred_check_branch
          %199 = sbr.rel (%p197) target = $region20
        $region19: #{tpu_custom_call.1} parent=15 // pred_region
          %s200 = sand.u32 %s50, 1
          %s201 = scalar_lea.sflag [#allocation5], %s200
          %s202 = sand.u32 %s50, 1
          %s203 = smul.addr %s202, 32
          %s204 = scalar_lea.vmem [#allocation4], %s203
          %s206 = ssub.s32 512, 512
          %207 = vsyncadd %s201, %s206
          %s208 = smul.addr %s26, 4
          %s209 = sadd.s32 %s27, %s208
          %s210 = smul.addr %s209, 128
          %s211 = scalar_lea.hbm %s0, %s210
          %s212 = sshll.u32 %s204, 4
          %s213 = int_to_ptr.vmem [resolvable:$true] %s212
          %218 = dma.hbm_to_vmem [thread:$0]  %s211, 512, %s213, %s201, 128, 128, 8
        $region20: #{tpu_custom_call.1} parent=15 // pred_fallthru
          _
        // Predicated region
        $region21: #{tpu_custom_call.1} parent=15 // pred_check
          %p219 = pneg %p88
        $region22: #{tpu_custom_call.1} parent=15 // pred_check_branch
          %221 = sbr.rel (%p219) target = $region24
        $region23: #{tpu_custom_call.1} parent=15 // pred_region
          %s222 = sand.u32 %s19, 1
          %s223 = scalar_lea.sflag [#allocation8], %s222
          %s224 = sand.u32 %s78, 1
          %s225 = smul.addr %s224, 32
          %s226 = scalar_lea.vmem [#allocation7], %s225
          %s228 = ssub.s32 512, 512
          %229 = vsyncadd %s223, %s228
          %s230 = smul.addr %s26, 4
          %s231 = sadd.s32 %s28, %s230
          %s232 = smul.addr %s231, 128
          %s233 = scalar_lea.hbm %s1, %s232
          %s234 = sshll.u32 %s226, 4
          %s235 = int_to_ptr.vmem [resolvable:$true] %s234
          %240 = dma.hbm_to_vmem [thread:$0]  %s233, 512, %s235, %s223, 128, 128, 8
        $region24: #{tpu_custom_call.1} parent=15 // pred_fallthru
          _
        // Predicated region
        $region25: #{tpu_custom_call.1} parent=15 // pred_check
          %p241 = pneg %p116
        $region26: #{tpu_custom_call.1} parent=15 // pred_check_branch
          %243 = sbr.rel (%p241) target = $region28
        $region27: #{tpu_custom_call.1} parent=15 // pred_region
          %s244 = sand.u32 %s19, 1
          %s245 = scalar_lea.sflag [#allocation8], %s244
          %s246 = sand.u32 %s106, 1
          %s247 = smul.addr %s246, 32
          %s248 = scalar_lea.vmem [#allocation9], %s247
          %s249 = smul.u32 8, %s28
          %s251 = ssub.s32 512, 512
          %252 = vsyncadd %s245, %s251
          %s253 = smul.addr %s26, 8
          %s254 = sadd.s32 %s249, %s253
          %s255 = smul.addr %s254, 64
          %s256 = scalar_lea.hbm %s2, %s255
          %s257 = sshll.u32 %s248, 4
          %s258 = int_to_ptr.vmem [resolvable:$true] %s257
          %263 = dma.hbm_to_vmem [thread:$0]  %s256, 512, %s258, %s245, 64, 64, 4
        $region28: #{tpu_custom_call.1} parent=15 // pred_fallthru
          _
        // Predicated region
        $region29: #{tpu_custom_call.1} parent=15 // pred_check
          %p264 = pneg %p144
        $region30: #{tpu_custom_call.1} parent=15 // pred_check_branch
          %266 = sbr.rel (%p264) target = $region32
        $region31: #{tpu_custom_call.1} parent=15 // pred_region
          %p267 = scmp.lt.s32.totalorder %s26, 1
          %s268 = scalar_select %p267, %s26, 1
          %p269 = scmp.lt.s32.totalorder %s28, 0
          %s270 = scalar_select %p269, %s28, 0
          %s271 = sadd.s32 %s270, %s268
          %s272 = scalar_lea.vmem %s3, %s271
        $region32: #{tpu_custom_call.1} parent=15 // pred_fallthru
          _
      $region16: #{tpu_custom_call.1} parent=5 // pred_fallthru
        _
      %p273 = scmp.le.s32.totalorder 1, %s19
      %p274 = scmp.lt.s32.totalorder %s19, 3
      %p275 = pnand %p273, %p274
      %p276 = pneg %p275
      // Predicated region
      $region33: #{tpu_custom_call.1} parent=5 // pred_check
        _
      $region34: #{tpu_custom_call.1} parent=5 // pred_check_branch
        %278 = sbr.rel (%p275) target = $region36
      $region35: #{tpu_custom_call.1} parent=5 // pred_region
        %s279 = ssub.s32 %s19, 1
        %s280 = sand.u32 %s53, 1
        %s281 = scalar_lea.sflag [#allocation5], %s280
        %s282 = sand.u32 %s53, 1
        %s283 = smul.addr %s282, 32
        %s284 = scalar_lea.vmem [#allocation4], %s283
        // Predicated region
        $region37: #{tpu_custom_call.1} parent=35 // pred_check
          %p285 = pneg %p66
        $region38: #{tpu_custom_call.1} parent=35 // pred_check_branch
          %287 = sbr.rel (%p285) target = $region40
        $region39: #{tpu_custom_call.1} parent=35 // pred_region
          %288 = dma.done %s281, 512
        $region40: #{tpu_custom_call.1} parent=35 // pred_fallthru
          _
        %s289 = sand.u32 %s24, 1
        %s290 = scalar_lea.sflag [#allocation8], %s289
        %s291 = sand.u32 %s81, 1
        %s292 = smul.addr %s291, 32
        %s293 = scalar_lea.vmem [#allocation7], %s292
        // Predicated region
        $region41: #{tpu_custom_call.1} parent=35 // pred_check
          %p294 = pneg %p94
        $region42: #{tpu_custom_call.1} parent=35 // pred_check_branch
          %296 = sbr.rel (%p294) target = $region44
        $region43: #{tpu_custom_call.1} parent=35 // pred_region
          %297 = dma.done %s290, 512
        $region44: #{tpu_custom_call.1} parent=35 // pred_fallthru
          _
        %s298 = sand.u32 %s24, 1
        %s299 = scalar_lea.sflag [#allocation8], %s298
        %s300 = sand.u32 %s109, 1
        %s301 = smul.addr %s300, 32
        %s302 = scalar_lea.vmem [#allocation9], %s301
        // Predicated region
        $region45: #{tpu_custom_call.1} parent=35 // pred_check
          %p303 = pneg %p122
        $region46: #{tpu_custom_call.1} parent=35 // pred_check_branch
          %305 = sbr.rel (%p303) target = $region48
        $region47: #{tpu_custom_call.1} parent=35 // pred_region
          %306 = dma.done %s299, 512
        $region48: #{tpu_custom_call.1} parent=35 // pred_fallthru
          _
        %s307 = sand.u32 %s53, 1
        %s308 = scalar_lea.sflag [#allocation5], %s307
        %s309 = sand.u32 %s53, 1
        %s310 = smul.addr %s309, 32
        %s311 = scalar_lea.vmem [#allocation4], %s310
        %p312 = pneg %p66
        %p313 = pneg %p63
        %s314 = sand.u32 %s24, 1
        %s315 = scalar_lea.sflag [#allocation8], %s314
        %s316 = sand.u32 %s81, 1
        %s317 = smul.addr %s316, 32
        %s318 = scalar_lea.vmem [#allocation7], %s317
        %p319 = pneg %p94
        %p320 = pneg %p91
        %s321 = sand.u32 %s24, 1
        %s322 = scalar_lea.sflag [#allocation8], %s321
        %s323 = sand.u32 %s109, 1
        %s324 = smul.addr %s323, 32
        %s325 = scalar_lea.vmem [#allocation9], %s324
        %p326 = pneg %p122
        %p327 = pneg %p119
        %p328 = scmp.lt.s32.totalorder %s29, 1
        %s329 = scalar_select %p328, %s29, 1
        %p330 = scmp.lt.s32.totalorder %s31, 0
        %s331 = scalar_select %p330, %s31, 0
        %s332 = sadd.s32 %s331, %s329
        %s333 = scalar_lea.vmem %s3, %s332
        %p334 = pneg %p150
        %p335 = pneg %p147
        %p336 = pneg %p178
        %p337 = pneg %p175
        %s338 = sand.u32 %s165, 1
        %s339 = scalar_lea.sflag [#allocation6], %s338
        %s340 = sand.u32 %s165, 1
        %s341 = smul.addr %s340, 32
        %s342 = scalar_lea.vmem [#allocation10], %s341
        %s343 = smul.u32 8, %s31
        %p344 = scmp.lt.s32.totalorder %s29, 1
        %s345 = scalar_select %p344, %s29, 1
        %p346 = scmp.lt.s32.totalorder %s31, 0
        %s347 = scalar_select %p346, %s31, 0
        %s348 = sadd.s32 %s347, %s345
        %s349 = scalar_lea.vmem %s3, %s348
        %s350 = smul.u32 8, %s30
        %p351 = scmp.eq.s32.totalorder %s31, 0
        // Predicated region
        $region49: #{tpu_custom_call.1} parent=35 // pred_check
          %p352 = pneg %p351
        $region50: #{tpu_custom_call.1} parent=35 // pred_check_branch
          %354 = sbr.rel (%p352) target = $region52
        $region51: #{tpu_custom_call.1} parent=35 // pred_region
          %vm355 = vcmask 261120
          %356 = vst.msk [vmem:[#allocation2] sm:$0xff] %vm355, 0.0
          %357 = vst.msk [vmem:[#allocation2 + $0x8] sm:$0xff] %vm355, 0.0
          %358 = vst.msk [vmem:[#allocation2 + $0x10] sm:$0xff] %vm355, 0.0
          %359 = vst.msk [vmem:[#allocation2 + $0x18] sm:$0xff] %vm355, 0.0
          %vm360 = vcmask 7168
          %361 = vst.msk [vmem:[#allocation3] sm:$0xff] %vm360, 0.0
          %362 = vst.msk [vmem:[#allocation3 + $0x8] sm:$0xff] %vm360, 0.0
          %363 = vst.msk [vmem:[#allocation3 + $0x10] sm:$0xff] %vm360, 0.0
          %364 = vst.msk [vmem:[#allocation3 + $0x18] sm:$0xff] %vm360, 0.0
        $region52: #{tpu_custom_call.1} parent=35 // pred_fallthru
          _
        %v365 = vld [vmem:[%s349] sm:$0x1]
        %v366 = vld [vmem:[%s284] sm:$0xff]
        %v367 = vld [vmem:[%s293] sm:$0xff]
        %v368 = vld [vmem:[%s302] sm:$0x1]
        %v369 = vld [vmem:[%s302 + $0x4] sm:$0x1]
        %v370 = vld [vmem:[%s302 + $0x8] sm:$0x1]
        %v371 = vld [vmem:[%s302 + $0xc] sm:$0x1]
        %v372 = vld [vmem:[%s302 + $0x10] sm:$0x1]
        %v373 = vld [vmem:[%s302 + $0x14] sm:$0x1]
        %v374 = vld [vmem:[%s302 + $0x18] sm:$0x1]
        %v375 = vld [vmem:[%s302 + $0x1c] sm:$0x1]
        %vm376 = vcmask 261120
        %v378 = vsel %vm376, %v366, 0
        %v381 = vsel %vm376, %v367, 0
        %383 = vmatprep.subr.mxu0 0.0
        %384 = vmatpush1.xpose.msra.mxu0 0.0
        %385 = vmatprep.subr.mxu0 0.0
        %386 = vmatpush1.xpose.msra.mxu0 0.0
        %387 = vmatprep.subr.mxu0 0.0
        %388 = vmatpush1.xpose.msra.mxu0 0.0
        %389 = vmatprep.subr.mxu0 0.0
        %390 = vmatpush1.xpose.msra.mxu0 0.0
        %391 = vmatprep.subr.mxu0 0.0
        %392 = vmatpush1.xpose.msra.mxu0 0.0
        %393 = vmatprep.subr.mxu0 0.0
        %394 = vmatpush1.xpose.msra.mxu0 0.0
        %395 = vmatprep.subr.mxu0 0.0
        %396 = vmatpush1.xpose.msra.mxu0 0.0
        %397 = vmatprep.subr.mxu0 0.0
        %398 = vmatpush1.xpose.msra.mxu0 0.0
        %399 = vmatprep.subr.mxu0 0.0
        %400 = vmatpush1.xpose.msra.mxu0 0.0
        %401 = vmatprep.subr.mxu0 0.0
        %402 = vmatpush1.xpose.msra.mxu0 0.0
        %403 = vmatprep.subr.mxu0 0.0
        %404 = vmatpush1.xpose.msra.mxu0 0.0
        %405 = vmatprep.subr.mxu0 0.0
        %406 = vmatpush1.xpose.msra.mxu0 0.0
        %407 = vmatprep.subr.mxu0 0.0
        %408 = vmatpush1.xpose.msra.mxu0 0.0
        %409 = vmatprep.subr.mxu0 0.0
        %410 = vmatpush1.xpose.msra.mxu0 0.0
        %411 = vmatprep.subr.mxu0 0.0
        %412 = vmatpush1.xpose.msra.mxu0 0.0
        %413 = vmatprep.subr.mxu0 0.0
        %414 = vmatpush1.xpose.msra.mxu0 %v381
        %415 = vmatprep.subr.mxu0 0.0
        %416 = vmatpush2.xpose.msra.mxu0 0.0
        %417 = vmatprep.subr.mxu0 0.0
        %418 = vmatpush2.xpose.msra.mxu0 0.0
        %419 = vmatprep.subr.mxu0 0.0
        %420 = vmatpush2.xpose.msra.mxu0 0.0
        %421 = vmatprep.subr.mxu0 0.0
        %422 = vmatpush2.xpose.msra.mxu0 0.0
        %423 = vmatprep.subr.mxu0 0.0
        %424 = vmatpush2.xpose.msra.mxu0 0.0
        %425 = vmatprep.subr.mxu0 0.0
        %426 = vmatpush2.xpose.msra.mxu0 0.0
        %427 = vmatprep.subr.mxu0 0.0
        %428 = vmatpush2.xpose.msra.mxu0 0.0
        %429 = vmatprep.subr.mxu0 0.0
        %430 = vmatpush2.xpose.msra.mxu0 0.0
        %431 = vmatprep.subr.mxu0 0.0
        %432 = vmatpush2.xpose.msra.mxu0 0.0
        %433 = vmatprep.subr.mxu0 0.0
        %434 = vmatpush2.xpose.msra.mxu0 0.0
        %435 = vmatprep.subr.mxu0 0.0
        %436 = vmatpush2.xpose.msra.mxu0 0.0
        %437 = vmatprep.subr.mxu0 0.0
        %438 = vmatpush2.xpose.msra.mxu0 0.0
        %439 = vmatprep.subr.mxu0 0.0
        %440 = vmatpush2.xpose.msra.mxu0 0.0
        %441 = vmatprep.subr.mxu0 0.0
        %442 = vmatpush2.xpose.msra.mxu0 0.0
        %443 = vmatprep.subr.mxu0 0.0
        %444 = vmatpush2.xpose.msra.mxu0 0.0
        %445 = vmatprep.subr.mxu0 0.0
        %446 = vmatpush2.xpose.msra.mxu0 0.0
        %447 = vmatprep.mubr.f32.mxu0 0.0
        %448 = vmatmul.mubr.f32.gmra.mxu0 %v378
        %v449 = vpop.f32.mrf.mxu0
        %v450 = vadd.f32 0.0, %v449
        %v451 = vpop.f32.mrf.mxu0
        %452 = vdwg.mxu0
        %v453 = vmul.f32 %v366, %v366
        %v454 = vsel %vm376, %v453, 0.0
        %455 = vadd.xlane.f32.xlu0 %v454
        %v456 = vpop.xlane.xlu0 %455
        %v457 = vmul.f32 %v367, %v367
        %v458 = vsel %vm376, %v457, 0.0
        %459 = vadd.xlane.f32.xlu0 %v458
        %v460 = vpop.xlane.xlu0 %459
        %461 = vxpose.xlu0.b32.start [1/16] %v460, 128
        %462 = vxpose.xlu0.b32.cont [2/16] 0.0, 128
        %463 = vxpose.xlu0.b32.cont [3/16] 0.0, 128
        %464 = vxpose.xlu0.b32.cont [4/16] 0.0, 128
        %465 = vxpose.xlu0.b32.cont [5/16] 0.0, 128
        %466 = vxpose.xlu0.b32.cont [6/16] 0.0, 128
        %467 = vxpose.xlu0.b32.cont [7/16] 0.0, 128
        %468 = vxpose.xlu0.b32.cont [8/16] 0.0, 128
        %469 = vxpose.xlu0.b32.cont [9/16] 0.0, 128
        %470 = vxpose.xlu0.b32.cont [10/16] 0.0, 128
        %471 = vxpose.xlu0.b32.cont [11/16] 0.0, 128
        %472 = vxpose.xlu0.b32.cont [12/16] 0.0, 128
        %473 = vxpose.xlu0.b32.cont [13/16] 0.0, 128
        %474 = vxpose.xlu0.b32.cont [14/16] 0.0, 128
        %475 = vxpose.xlu0.b32.cont [15/16] 0.0, 128
        %476 = vxpose.xlu0.b32.end [16/16] 0.0, 128
        %v477 = vpop.trf.xlu0
        %v478 = vpop.trf.xlu0
        %v479 = vpop.trf.xlu0
        %v480 = vpop.trf.xlu0
        %v481 = vpop.trf.xlu0
        %v482 = vpop.trf.xlu0
        %v483 = vpop.trf.xlu0
        %v484 = vpop.trf.xlu0
        %v485 = vpop.trf.xlu0
        %v486 = vpop.trf.xlu0
        %v487 = vpop.trf.xlu0
        %v488 = vpop.trf.xlu0
        %v489 = vpop.trf.xlu0
        %v490 = vpop.trf.xlu0
        %v491 = vpop.trf.xlu0
        %v492 = vpop.trf.xlu0
        %v493 = vlaneseq
        %v494 = vshrl.u32 %v493, 7
        %v495 = vsub.s32 0, %v494
        %v496 = vrot.slane %v477, %v495
        %v497 = vadd.f32 %v456, %v496
        %v498 = vmul.f32 %v450, 2.0
        %v499 = vsub.f32 %v497, %v498
        %v500 = vmax.f32 %v499, 0.0
        %v501 = vmul.f32 %v500, -0.088388346
        %v502 = vmul.f32 %v501, 1.442695
        %v503 = vpow.pop %v502
        %v505 = vlaneseq
        %v506 = vshrl.u32 %v505, 7
        %v507 = vsub.s32 0, %v506
        %v508 = vrot.slane %v365, %v507
        %v510 = vmul.f32 %v503, %v508
        %v511 = vld [vmem:[#allocation3] sm:$0xff]
        %vm512 = vcmask 64512
        %v513 = vsel %vm512, %v510, 0.0
        %514 = vadd.xlane.f32.xlu0 %v513
        %v515 = vpop.xlane.xlu0 %514
        %v516 = vadd.f32 %v511, %v515
        %vm517 = vcmask 7168
        %518 = vst.msk [vmem:[#allocation3] sm:$0xff] %vm517, %v516
        %v519 = vld [vmem:[#allocation2] sm:$0xff]
        %v528 = vrot.slane %v369, 7
        %vm529 = vcmask 1041409
        %v530 = vsel %vm529, %v528, %v368
        %v531 = vrot.slane %v370, 6
        %vm532 = vcmask 1042434
        %v533 = vsel %vm532, %v531, %v530
        %v534 = vrot.slane %v371, 5
        %vm535 = vcmask 1043459
        %v536 = vsel %vm535, %v534, %v533
        %v537 = vrot.slane %v372, 4
        %vm538 = vcmask 1044484
        %v539 = vsel %vm538, %v537, %v536
        %v540 = vrot.slane %v373, 3
        %vm541 = vcmask 1045509
        %v542 = vsel %vm541, %v540, %v539
        %v543 = vrot.slane %v374, 2
        %vm544 = vcmask 1046534
        %v545 = vsel %vm544, %v543, %v542
        %v546 = vrot.slane %v375, 1
        %vm547 = vcmask 1047559
        %v548 = vsel %vm547, %v546, %v545
        %v551 = vsel %vm512, %v510, 0
        %553 = vmatprep.subr.mxu0 0.0
        %554 = vmatpush1.msra.mxu0 0.0
        %555 = vmatprep.subr.mxu0 0.0
        %556 = vmatpush1.msra.mxu0 0.0
        %557 = vmatprep.subr.mxu0 0.0
        %558 = vmatpush1.msra.mxu0 0.0
        %559 = vmatprep.subr.mxu0 0.0
        %560 = vmatpush1.msra.mxu0 0.0
        %561 = vmatprep.subr.mxu0 0.0
        %562 = vmatpush1.msra.mxu0 0.0
        %563 = vmatprep.subr.mxu0 0.0
        %564 = vmatpush1.msra.mxu0 0.0
        %565 = vmatprep.subr.mxu0 0.0
        %566 = vmatpush1.msra.mxu0 0.0
        %567 = vmatprep.subr.mxu0 0.0
        %568 = vmatpush1.msra.mxu0 0.0
        %569 = vmatprep.subr.mxu0 0.0
        %570 = vmatpush1.msra.mxu0 0.0
        %571 = vmatprep.subr.mxu0 0.0
        %572 = vmatpush1.msra.mxu0 0.0
        %573 = vmatprep.subr.mxu0 0.0
        %574 = vmatpush1.msra.mxu0 0.0
        %575 = vmatprep.subr.mxu0 0.0
        %576 = vmatpush1.msra.mxu0 0.0
        %577 = vmatprep.subr.mxu0 0.0
        %578 = vmatpush1.msra.mxu0 0.0
        %579 = vmatprep.subr.mxu0 0.0
        %580 = vmatpush1.msra.mxu0 0.0
        %581 = vmatprep.subr.mxu0 0.0
        %582 = vmatpush1.msra.mxu0 0.0
        %583 = vmatprep.subr.mxu0 0.0
        %584 = vmatpush1.msra.mxu0 %v548
        %585 = vmatprep.subr.mxu0 0.0
        %586 = vmatpush2.msra.mxu0 0.0
        %587 = vmatprep.subr.mxu0 0.0
        %588 = vmatpush2.msra.mxu0 0.0
        %589 = vmatprep.subr.mxu0 0.0
        %590 = vmatpush2.msra.mxu0 0.0
        %591 = vmatprep.subr.mxu0 0.0
        %592 = vmatpush2.msra.mxu0 0.0
        %593 = vmatprep.subr.mxu0 0.0
        %594 = vmatpush2.msra.mxu0 0.0
        %595 = vmatprep.subr.mxu0 0.0
        %596 = vmatpush2.msra.mxu0 0.0
        %597 = vmatprep.subr.mxu0 0.0
        %598 = vmatpush2.msra.mxu0 0.0
        %599 = vmatprep.subr.mxu0 0.0
        %600 = vmatpush2.msra.mxu0 0.0
        %601 = vmatprep.subr.mxu0 0.0
        %602 = vmatpush2.msra.mxu0 0.0
        %603 = vmatprep.subr.mxu0 0.0
        %604 = vmatpush2.msra.mxu0 0.0
        %605 = vmatprep.subr.mxu0 0.0
        %606 = vmatpush2.msra.mxu0 0.0
        %607 = vmatprep.subr.mxu0 0.0
        %608 = vmatpush2.msra.mxu0 0.0
        %609 = vmatprep.subr.mxu0 0.0
        %610 = vmatpush2.msra.mxu0 0.0
        %611 = vmatprep.subr.mxu0 0.0
        %612 = vmatpush2.msra.mxu0 0.0
        %613 = vmatprep.subr.mxu0 0.0
        %614 = vmatpush2.msra.mxu0 0.0
        %615 = vmatprep.subr.mxu0 0.0
        %616 = vmatpush2.msra.mxu0 0.0
        %617 = vmatprep.mubr.f32.mxu0 0.0
        %618 = vmatmul.mubr.f32.gmra.mxu0 %v551
        %v619 = vpop.f32.mrf.mxu0
        %v620 = vadd.f32 0.0, %v619
        %v621 = vpop.f32.mrf.mxu0
        %622 = vdwg.mxu0
        %v623 = vadd.f32 %v519, %v620
        %624 = vst.msk [vmem:[#allocation2] sm:$0xff] %vm376, %v623
        %s625 = scalar_lea.vmem %s284, 8 [#allocation4]
        %v626 = vld [vmem:[%s625] sm:$0xff]
        %s627 = scalar_lea.vmem %s293, 8 [#allocation7]
        %v628 = vld [vmem:[%s627] sm:$0xff]
        %v629 = vld [vmem:[%s302 + $0x1] sm:$0x1]
        %v630 = vld [vmem:[%s302 + $0x5] sm:$0x1]
        %v631 = vld [vmem:[%s302 + $0x9] sm:$0x1]
        %v632 = vld [vmem:[%s302 + $0xd] sm:$0x1]
        %v633 = vld [vmem:[%s302 + $0x11] sm:$0x1]
        %v634 = vld [vmem:[%s302 + $0x15] sm:$0x1]
        %v635 = vld [vmem:[%s302 + $0x19] sm:$0x1]
        %v636 = vld [vmem:[%s302 + $0x1d] sm:$0x1]
        %v638 = vsel %vm376, %v626, 0
        %v641 = vsel %vm376, %v628, 0
        %643 = vmatprep.subr.mxu0 0.0
        %644 = vmatpush1.xpose.msra.mxu0 0.0
        %645 = vmatprep.subr.mxu0 0.0
        %646 = vmatpush1.xpose.msra.mxu0 0.0
        %647 = vmatprep.subr.mxu0 0.0
        %648 = vmatpush1.xpose.msra.mxu0 0.0
        %649 = vmatprep.subr.mxu0 0.0
        %650 = vmatpush1.xpose.msra.mxu0 0.0
        %651 = vmatprep.subr.mxu0 0.0
        %652 = vmatpush1.xpose.msra.mxu0 0.0
        %653 = vmatprep.subr.mxu0 0.0
        %654 = vmatpush1.xpose.msra.mxu0 0.0
        %655 = vmatprep.subr.mxu0 0.0
        %656 = vmatpush1.xpose.msra.mxu0 0.0
        %657 = vmatprep.subr.mxu0 0.0
        %658 = vmatpush1.xpose.msra.mxu0 0.0
        %659 = vmatprep.subr.mxu0 0.0
        %660 = vmatpush1.xpose.msra.mxu0 0.0
        %661 = vmatprep.subr.mxu0 0.0
        %662 = vmatpush1.xpose.msra.mxu0 0.0
        %663 = vmatprep.subr.mxu0 0.0
        %664 = vmatpush1.xpose.msra.mxu0 0.0
        %665 = vmatprep.subr.mxu0 0.0
        %666 = vmatpush1.xpose.msra.mxu0 0.0
        %667 = vmatprep.subr.mxu0 0.0
        %668 = vmatpush1.xpose.msra.mxu0 0.0
        %669 = vmatprep.subr.mxu0 0.0
        %670 = vmatpush1.xpose.msra.mxu0 0.0
        %671 = vmatprep.subr.mxu0 0.0
        %672 = vmatpush1.xpose.msra.mxu0 0.0
        %673 = vmatprep.subr.mxu0 0.0
        %674 = vmatpush1.xpose.msra.mxu0 %v641
        %675 = vmatprep.subr.mxu0 0.0
        %676 = vmatpush2.xpose.msra.mxu0 0.0
        %677 = vmatprep.subr.mxu0 0.0
        %678 = vmatpush2.xpose.msra.mxu0 0.0
        %679 = vmatprep.subr.mxu0 0.0
        %680 = vmatpush2.xpose.msra.mxu0 0.0
        %681 = vmatprep.subr.mxu0 0.0
        %682 = vmatpush2.xpose.msra.mxu0 0.0
        %683 = vmatprep.subr.mxu0 0.0
        %684 = vmatpush2.xpose.msra.mxu0 0.0
        %685 = vmatprep.subr.mxu0 0.0
        %686 = vmatpush2.xpose.msra.mxu0 0.0
        %687 = vmatprep.subr.mxu0 0.0
        %688 = vmatpush2.xpose.msra.mxu0 0.0
        %689 = vmatprep.subr.mxu0 0.0
        %690 = vmatpush2.xpose.msra.mxu0 0.0
        %691 = vmatprep.subr.mxu0 0.0
        %692 = vmatpush2.xpose.msra.mxu0 0.0
        %693 = vmatprep.subr.mxu0 0.0
        %694 = vmatpush2.xpose.msra.mxu0 0.0
        %695 = vmatprep.subr.mxu0 0.0
        %696 = vmatpush2.xpose.msra.mxu0 0.0
        %697 = vmatprep.subr.mxu0 0.0
        %698 = vmatpush2.xpose.msra.mxu0 0.0
        %699 = vmatprep.subr.mxu0 0.0
        %700 = vmatpush2.xpose.msra.mxu0 0.0
        %701 = vmatprep.subr.mxu0 0.0
        %702 = vmatpush2.xpose.msra.mxu0 0.0
        %703 = vmatprep.subr.mxu0 0.0
        %704 = vmatpush2.xpose.msra.mxu0 0.0
        %705 = vmatprep.subr.mxu0 0.0
        %706 = vmatpush2.xpose.msra.mxu0 0.0
        %707 = vmatprep.mubr.f32.mxu0 0.0
        %708 = vmatmul.mubr.f32.gmra.mxu0 %v638
        %v709 = vpop.f32.mrf.mxu0
        %v710 = vadd.f32 0.0, %v709
        %v711 = vpop.f32.mrf.mxu0
        %712 = vdwg.mxu0
        %v713 = vmul.f32 %v626, %v626
        %v714 = vsel %vm376, %v713, 0.0
        %715 = vadd.xlane.f32.xlu0 %v714
        %v716 = vpop.xlane.xlu0 %715
        %v717 = vmul.f32 %v628, %v628
        %v718 = vsel %vm376, %v717, 0.0
        %719 = vadd.xlane.f32.xlu0 %v718
        %v720 = vpop.xlane.xlu0 %719
        %721 = vxpose.xlu0.b32.start [1/16] %v720, 128
        %722 = vxpose.xlu0.b32.cont [2/16] 0.0, 128
        %723 = vxpose.xlu0.b32.cont [3/16] 0.0, 128
        %724 = vxpose.xlu0.b32.cont [4/16] 0.0, 128
        %725 = vxpose.xlu0.b32.cont [5/16] 0.0, 128
        %726 = vxpose.xlu0.b32.cont [6/16] 0.0, 128
        %727 = vxpose.xlu0.b32.cont [7/16] 0.0, 128
        %728 = vxpose.xlu0.b32.cont [8/16] 0.0, 128
        %729 = vxpose.xlu0.b32.cont [9/16] 0.0, 128
        %730 = vxpose.xlu0.b32.cont [10/16] 0.0, 128
        %731 = vxpose.xlu0.b32.cont [11/16] 0.0, 128
        %732 = vxpose.xlu0.b32.cont [12/16] 0.0, 128
        %733 = vxpose.xlu0.b32.cont [13/16] 0.0, 128
        %734 = vxpose.xlu0.b32.cont [14/16] 0.0, 128
        %735 = vxpose.xlu0.b32.cont [15/16] 0.0, 128
        %736 = vxpose.xlu0.b32.end [16/16] 0.0, 128
        %v737 = vpop.trf.xlu0
        %v738 = vpop.trf.xlu0
        %v739 = vpop.trf.xlu0
        %v740 = vpop.trf.xlu0
        %v741 = vpop.trf.xlu0
        %v742 = vpop.trf.xlu0
        %v743 = vpop.trf.xlu0
        %v744 = vpop.trf.xlu0
        %v745 = vpop.trf.xlu0
        %v746 = vpop.trf.xlu0
        %v747 = vpop.trf.xlu0
        %v748 = vpop.trf.xlu0
        %v749 = vpop.trf.xlu0
        %v750 = vpop.trf.xlu0
        %v751 = vpop.trf.xlu0
        %v752 = vpop.trf.xlu0
        %v753 = vlaneseq
        %v754 = vshrl.u32 %v753, 7
        %v755 = vsub.s32 0, %v754
        %v756 = vrot.slane %v737, %v755
        %v757 = vadd.f32 %v716, %v756
        %v758 = vmul.f32 %v710, 2.0
        %v759 = vsub.f32 %v757, %v758
        %v760 = vmax.f32 %v759, 0.0
        %v761 = vmul.f32 %v760, -0.088388346
        %v762 = vmul.f32 %v761, 1.442695
        %v763 = vpow.pop %v762
        %v764 = vmul.f32 %v763, %v508
        %s765 = scalar_lea.vmem [#allocation3], 8
        %v766 = vld [vmem:[%s765] sm:$0xff]
        %v767 = vsel %vm512, %v764, 0.0
        %768 = vadd.xlane.f32.xlu0 %v767
        %v769 = vpop.xlane.xlu0 %768
        %v770 = vadd.f32 %v766, %v769
        %771 = vst.msk [vmem:[%s765] sm:$0xff] %vm517, %v770
        %s772 = scalar_lea.vmem [#allocation2], 8
        %v773 = vld [vmem:[%s772] sm:$0xff]
        %v782 = vrot.slane %v630, 7
        %v783 = vsel %vm529, %v782, %v629
        %v784 = vrot.slane %v631, 6
        %v785 = vsel %vm532, %v784, %v783
        %v786 = vrot.slane %v632, 5
        %v787 = vsel %vm535, %v786, %v785
        %v788 = vrot.slane %v633, 4
        %v789 = vsel %vm538, %v788, %v787
        %v790 = vrot.slane %v634, 3
        %v791 = vsel %vm541, %v790, %v789
        %v792 = vrot.slane %v635, 2
        %v793 = vsel %vm544, %v792, %v791
        %v794 = vrot.slane %v636, 1
        %v795 = vsel %vm547, %v794, %v793
        %v798 = vsel %vm512, %v764, 0
        %800 = vmatprep.subr.mxu0 0.0
        %801 = vmatpush1.msra.mxu0 0.0
        %802 = vmatprep.subr.mxu0 0.0
        %803 = vmatpush1.msra.mxu0 0.0
        %804 = vmatprep.subr.mxu0 0.0
        %805 = vmatpush1.msra.mxu0 0.0
        %806 = vmatprep.subr.mxu0 0.0
        %807 = vmatpush1.msra.mxu0 0.0
        %808 = vmatprep.subr.mxu0 0.0
        %809 = vmatpush1.msra.mxu0 0.0
        %810 = vmatprep.subr.mxu0 0.0
        %811 = vmatpush1.msra.mxu0 0.0
        %812 = vmatprep.subr.mxu0 0.0
        %813 = vmatpush1.msra.mxu0 0.0
        %814 = vmatprep.subr.mxu0 0.0
        %815 = vmatpush1.msra.mxu0 0.0
        %816 = vmatprep.subr.mxu0 0.0
        %817 = vmatpush1.msra.mxu0 0.0
        %818 = vmatprep.subr.mxu0 0.0
        %819 = vmatpush1.msra.mxu0 0.0
        %820 = vmatprep.subr.mxu0 0.0
        %821 = vmatpush1.msra.mxu0 0.0
        %822 = vmatprep.subr.mxu0 0.0
        %823 = vmatpush1.msra.mxu0 0.0
        %824 = vmatprep.subr.mxu0 0.0
        %825 = vmatpush1.msra.mxu0 0.0
        %826 = vmatprep.subr.mxu0 0.0
        %827 = vmatpush1.msra.mxu0 0.0
        %828 = vmatprep.subr.mxu0 0.0
        %829 = vmatpush1.msra.mxu0 0.0
        %830 = vmatprep.subr.mxu0 0.0
        %831 = vmatpush1.msra.mxu0 %v795
        %832 = vmatprep.subr.mxu0 0.0
        %833 = vmatpush2.msra.mxu0 0.0
        %834 = vmatprep.subr.mxu0 0.0
        %835 = vmatpush2.msra.mxu0 0.0
        %836 = vmatprep.subr.mxu0 0.0
        %837 = vmatpush2.msra.mxu0 0.0
        %838 = vmatprep.subr.mxu0 0.0
        %839 = vmatpush2.msra.mxu0 0.0
        %840 = vmatprep.subr.mxu0 0.0
        %841 = vmatpush2.msra.mxu0 0.0
        %842 = vmatprep.subr.mxu0 0.0
        %843 = vmatpush2.msra.mxu0 0.0
        %844 = vmatprep.subr.mxu0 0.0
        %845 = vmatpush2.msra.mxu0 0.0
        %846 = vmatprep.subr.mxu0 0.0
        %847 = vmatpush2.msra.mxu0 0.0
        %848 = vmatprep.subr.mxu0 0.0
        %849 = vmatpush2.msra.mxu0 0.0
        %850 = vmatprep.subr.mxu0 0.0
        %851 = vmatpush2.msra.mxu0 0.0
        %852 = vmatprep.subr.mxu0 0.0
        %853 = vmatpush2.msra.mxu0 0.0
        %854 = vmatprep.subr.mxu0 0.0
        %855 = vmatpush2.msra.mxu0 0.0
        %856 = vmatprep.subr.mxu0 0.0
        %857 = vmatpush2.msra.mxu0 0.0
        %858 = vmatprep.subr.mxu0 0.0
        %859 = vmatpush2.msra.mxu0 0.0
        %860 = vmatprep.subr.mxu0 0.0
        %861 = vmatpush2.msra.mxu0 0.0
        %862 = vmatprep.subr.mxu0 0.0
        %863 = vmatpush2.msra.mxu0 0.0
        %864 = vmatprep.mubr.f32.mxu0 0.0
        %865 = vmatmul.mubr.f32.gmra.mxu0 %v798
        %v866 = vpop.f32.mrf.mxu0
        %v867 = vadd.f32 0.0, %v866
        %v868 = vpop.f32.mrf.mxu0
        %869 = vdwg.mxu0
        %v870 = vadd.f32 %v773, %v867
        %871 = vst.msk [vmem:[%s772] sm:$0xff] %vm376, %v870
        %s872 = scalar_lea.vmem %s284, 16 [#allocation4]
        %v873 = vld [vmem:[%s872] sm:$0xff]
        %s874 = scalar_lea.vmem %s293, 16 [#allocation7]
        %v875 = vld [vmem:[%s874] sm:$0xff]
        %v876 = vld [vmem:[%s302 + $0x2] sm:$0x1]
        %v877 = vld [vmem:[%s302 + $0x6] sm:$0x1]
        %v878 = vld [vmem:[%s302 + $0xa] sm:$0x1]
        %v879 = vld [vmem:[%s302 + $0xe] sm:$0x1]
        %v880 = vld [vmem:[%s302 + $0x12] sm:$0x1]
        %v881 = vld [vmem:[%s302 + $0x16] sm:$0x1]
        %v882 = vld [vmem:[%s302 + $0x1a] sm:$0x1]
        %v883 = vld [vmem:[%s302 + $0x1e] sm:$0x1]
        %v885 = vsel %vm376, %v873, 0
        %v888 = vsel %vm376, %v875, 0
        %890 = vmatprep.subr.mxu0 0.0
        %891 = vmatpush1.xpose.msra.mxu0 0.0
        %892 = vmatprep.subr.mxu0 0.0
        %893 = vmatpush1.xpose.msra.mxu0 0.0
        %894 = vmatprep.subr.mxu0 0.0
        %895 = vmatpush1.xpose.msra.mxu0 0.0
        %896 = vmatprep.subr.mxu0 0.0
        %897 = vmatpush1.xpose.msra.mxu0 0.0
        %898 = vmatprep.subr.mxu0 0.0
        %899 = vmatpush1.xpose.msra.mxu0 0.0
        %900 = vmatprep.subr.mxu0 0.0
        %901 = vmatpush1.xpose.msra.mxu0 0.0
        %902 = vmatprep.subr.mxu0 0.0
        %903 = vmatpush1.xpose.msra.mxu0 0.0
        %904 = vmatprep.subr.mxu0 0.0
        %905 = vmatpush1.xpose.msra.mxu0 0.0
        %906 = vmatprep.subr.mxu0 0.0
        %907 = vmatpush1.xpose.msra.mxu0 0.0
        %908 = vmatprep.subr.mxu0 0.0
        %909 = vmatpush1.xpose.msra.mxu0 0.0
        %910 = vmatprep.subr.mxu0 0.0
        %911 = vmatpush1.xpose.msra.mxu0 0.0
        %912 = vmatprep.subr.mxu0 0.0
        %913 = vmatpush1.xpose.msra.mxu0 0.0
        %914 = vmatprep.subr.mxu0 0.0
        %915 = vmatpush1.xpose.msra.mxu0 0.0
        %916 = vmatprep.subr.mxu0 0.0
        %917 = vmatpush1.xpose.msra.mxu0 0.0
        %918 = vmatprep.subr.mxu0 0.0
        %919 = vmatpush1.xpose.msra.mxu0 0.0
        %920 = vmatprep.subr.mxu0 0.0
        %921 = vmatpush1.xpose.msra.mxu0 %v888
        %922 = vmatprep.subr.mxu0 0.0
        %923 = vmatpush2.xpose.msra.mxu0 0.0
        %924 = vmatprep.subr.mxu0 0.0
        %925 = vmatpush2.xpose.msra.mxu0 0.0
        %926 = vmatprep.subr.mxu0 0.0
        %927 = vmatpush2.xpose.msra.mxu0 0.0
        %928 = vmatprep.subr.mxu0 0.0
        %929 = vmatpush2.xpose.msra.mxu0 0.0
        %930 = vmatprep.subr.mxu0 0.0
        %931 = vmatpush2.xpose.msra.mxu0 0.0
        %932 = vmatprep.subr.mxu0 0.0
        %933 = vmatpush2.xpose.msra.mxu0 0.0
        %934 = vmatprep.subr.mxu0 0.0
        %935 = vmatpush2.xpose.msra.mxu0 0.0
        %936 = vmatprep.subr.mxu0 0.0
        %937 = vmatpush2.xpose.msra.mxu0 0.0
        %938 = vmatprep.subr.mxu0 0.0
        %939 = vmatpush2.xpose.msra.mxu0 0.0
        %940 = vmatprep.subr.mxu0 0.0
        %941 = vmatpush2.xpose.msra.mxu0 0.0
        %942 = vmatprep.subr.mxu0 0.0
        %943 = vmatpush2.xpose.msra.mxu0 0.0
        %944 = vmatprep.subr.mxu0 0.0
        %945 = vmatpush2.xpose.msra.mxu0 0.0
        %946 = vmatprep.subr.mxu0 0.0
        %947 = vmatpush2.xpose.msra.mxu0 0.0
        %948 = vmatprep.subr.mxu0 0.0
        %949 = vmatpush2.xpose.msra.mxu0 0.0
        %950 = vmatprep.subr.mxu0 0.0
        %951 = vmatpush2.xpose.msra.mxu0 0.0
        %952 = vmatprep.subr.mxu0 0.0
        %953 = vmatpush2.xpose.msra.mxu0 0.0
        %954 = vmatprep.mubr.f32.mxu0 0.0
        %955 = vmatmul.mubr.f32.gmra.mxu0 %v885
        %v956 = vpop.f32.mrf.mxu0
        %v957 = vadd.f32 0.0, %v956
        %v958 = vpop.f32.mrf.mxu0
        %959 = vdwg.mxu0
        %v960 = vmul.f32 %v873, %v873
        %v961 = vsel %vm376, %v960, 0.0
        %962 = vadd.xlane.f32.xlu0 %v961
        %v963 = vpop.xlane.xlu0 %962
        %v964 = vmul.f32 %v875, %v875
        %v965 = vsel %vm376, %v964, 0.0
        %966 = vadd.xlane.f32.xlu0 %v965
        %v967 = vpop.xlane.xlu0 %966
        %968 = vxpose.xlu0.b32.start [1/16] %v967, 128
        %969 = vxpose.xlu0.b32.cont [2/16] 0.0, 128
        %970 = vxpose.xlu0.b32.cont [3/16] 0.0, 128
        %971 = vxpose.xlu0.b32.cont [4/16] 0.0, 128
        %972 = vxpose.xlu0.b32.cont [5/16] 0.0, 128
        %973 = vxpose.xlu0.b32.cont [6/16] 0.0, 128
        %974 = vxpose.xlu0.b32.cont [7/16] 0.0, 128
        %975 = vxpose.xlu0.b32.cont [8/16] 0.0, 128
        %976 = vxpose.xlu0.b32.cont [9/16] 0.0, 128
        %977 = vxpose.xlu0.b32.cont [10/16] 0.0, 128
        %978 = vxpose.xlu0.b32.cont [11/16] 0.0, 128
        %979 = vxpose.xlu0.b32.cont [12/16] 0.0, 128
        %980 = vxpose.xlu0.b32.cont [13/16] 0.0, 128
        %981 = vxpose.xlu0.b32.cont [14/16] 0.0, 128
        %982 = vxpose.xlu0.b32.cont [15/16] 0.0, 128
        %983 = vxpose.xlu0.b32.end [16/16] 0.0, 128
        %v984 = vpop.trf.xlu0
        %v985 = vpop.trf.xlu0
        %v986 = vpop.trf.xlu0
        %v987 = vpop.trf.xlu0
        %v988 = vpop.trf.xlu0
        %v989 = vpop.trf.xlu0
        %v990 = vpop.trf.xlu0
        %v991 = vpop.trf.xlu0
        %v992 = vpop.trf.xlu0
        %v993 = vpop.trf.xlu0
        %v994 = vpop.trf.xlu0
        %v995 = vpop.trf.xlu0
        %v996 = vpop.trf.xlu0
        %v997 = vpop.trf.xlu0
        %v998 = vpop.trf.xlu0
        %v999 = vpop.trf.xlu0
        %v1000 = vlaneseq
        %v1001 = vshrl.u32 %v1000, 7
        %v1002 = vsub.s32 0, %v1001
        %v1003 = vrot.slane %v984, %v1002
        %v1004 = vadd.f32 %v963, %v1003
        %v1005 = vmul.f32 %v957, 2.0
        %v1006 = vsub.f32 %v1004, %v1005
        %v1007 = vmax.f32 %v1006, 0.0
        %v1008 = vmul.f32 %v1007, -0.088388346
        %v1009 = vmul.f32 %v1008, 1.442695
        %v1010 = vpow.pop %v1009
        %v1011 = vmul.f32 %v1010, %v508
        %s1012 = scalar_lea.vmem [#allocation3], 16
        %v1013 = vld [vmem:[%s1012] sm:$0xff]
        %v1014 = vsel %vm512, %v1011, 0.0
        %1015 = vadd.xlane.f32.xlu0 %v1014
        %v1016 = vpop.xlane.xlu0 %1015
        %v1017 = vadd.f32 %v1013, %v1016
        %1018 = vst.msk [vmem:[%s1012] sm:$0xff] %vm517, %v1017
        %s1019 = scalar_lea.vmem [#allocation2], 16
        %v1020 = vld [vmem:[%s1019] sm:$0xff]
        %v1029 = vrot.slane %v877, 7
        %v1030 = vsel %vm529, %v1029, %v876
        %v1031 = vrot.slane %v878, 6
        %v1032 = vsel %vm532, %v1031, %v1030
        %v1033 = vrot.slane %v879, 5
        %v1034 = vsel %vm535, %v1033, %v1032
        %v1035 = vrot.slane %v880, 4
        %v1036 = vsel %vm538, %v1035, %v1034
        %v1037 = vrot.slane %v881, 3
        %v1038 = vsel %vm541, %v1037, %v1036
        %v1039 = vrot.slane %v882, 2
        %v1040 = vsel %vm544, %v1039, %v1038
        %v1041 = vrot.slane %v883, 1
        %v1042 = vsel %vm547, %v1041, %v1040
        %v1045 = vsel %vm512, %v1011, 0
        %1047 = vmatprep.subr.mxu0 0.0
        %1048 = vmatpush1.msra.mxu0 0.0
        %1049 = vmatprep.subr.mxu0 0.0
        %1050 = vmatpush1.msra.mxu0 0.0
        %1051 = vmatprep.subr.mxu0 0.0
        %1052 = vmatpush1.msra.mxu0 0.0
        %1053 = vmatprep.subr.mxu0 0.0
        %1054 = vmatpush1.msra.mxu0 0.0
        %1055 = vmatprep.subr.mxu0 0.0
        %1056 = vmatpush1.msra.mxu0 0.0
        %1057 = vmatprep.subr.mxu0 0.0
        %1058 = vmatpush1.msra.mxu0 0.0
        %1059 = vmatprep.subr.mxu0 0.0
        %1060 = vmatpush1.msra.mxu0 0.0
        %1061 = vmatprep.subr.mxu0 0.0
        %1062 = vmatpush1.msra.mxu0 0.0
        %1063 = vmatprep.subr.mxu0 0.0
        %1064 = vmatpush1.msra.mxu0 0.0
        %1065 = vmatprep.subr.mxu0 0.0
        %1066 = vmatpush1.msra.mxu0 0.0
        %1067 = vmatprep.subr.mxu0 0.0
        %1068 = vmatpush1.msra.mxu0 0.0
        %1069 = vmatprep.subr.mxu0 0.0
        %1070 = vmatpush1.msra.mxu0 0.0
        %1071 = vmatprep.subr.mxu0 0.0
        %1072 = vmatpush1.msra.mxu0 0.0
        %1073 = vmatprep.subr.mxu0 0.0
        %1074 = vmatpush1.msra.mxu0 0.0
        %1075 = vmatprep.subr.mxu0 0.0
        %1076 = vmatpush1.msra.mxu0 0.0
        %1077 = vmatprep.subr.mxu0 0.0
        %1078 = vmatpush1.msra.mxu0 %v1042
        %1079 = vmatprep.subr.mxu0 0.0
        %1080 = vmatpush2.msra.mxu0 0.0
        %1081 = vmatprep.subr.mxu0 0.0
        %1082 = vmatpush2.msra.mxu0 0.0
        %1083 = vmatprep.subr.mxu0 0.0
        %1084 = vmatpush2.msra.mxu0 0.0
        %1085 = vmatprep.subr.mxu0 0.0
        %1086 = vmatpush2.msra.mxu0 0.0
        %1087 = vmatprep.subr.mxu0 0.0
        %1088 = vmatpush2.msra.mxu0 0.0
        %1089 = vmatprep.subr.mxu0 0.0
        %1090 = vmatpush2.msra.mxu0 0.0
        %1091 = vmatprep.subr.mxu0 0.0
        %1092 = vmatpush2.msra.mxu0 0.0
        %1093 = vmatprep.subr.mxu0 0.0
        %1094 = vmatpush2.msra.mxu0 0.0
        %1095 = vmatprep.subr.mxu0 0.0
        %1096 = vmatpush2.msra.mxu0 0.0
        %1097 = vmatprep.subr.mxu0 0.0
        %1098 = vmatpush2.msra.mxu0 0.0
        %1099 = vmatprep.subr.mxu0 0.0
        %1100 = vmatpush2.msra.mxu0 0.0
        %1101 = vmatprep.subr.mxu0 0.0
        %1102 = vmatpush2.msra.mxu0 0.0
        %1103 = vmatprep.subr.mxu0 0.0
        %1104 = vmatpush2.msra.mxu0 0.0
        %1105 = vmatprep.subr.mxu0 0.0
        %1106 = vmatpush2.msra.mxu0 0.0
        %1107 = vmatprep.subr.mxu0 0.0
        %1108 = vmatpush2.msra.mxu0 0.0
        %1109 = vmatprep.subr.mxu0 0.0
        %1110 = vmatpush2.msra.mxu0 0.0
        %1111 = vmatprep.mubr.f32.mxu0 0.0
        %1112 = vmatmul.mubr.f32.gmra.mxu0 %v1045
        %v1113 = vpop.f32.mrf.mxu0
        %v1114 = vadd.f32 0.0, %v1113
        %v1115 = vpop.f32.mrf.mxu0
        %1116 = vdwg.mxu0
        %v1117 = vadd.f32 %v1020, %v1114
        %1118 = vst.msk [vmem:[%s1019] sm:$0xff] %vm376, %v1117
        %s1119 = scalar_lea.vmem %s284, 24 [#allocation4]
        %v1120 = vld [vmem:[%s1119] sm:$0xff]
        %s1121 = scalar_lea.vmem %s293, 24 [#allocation7]
        %v1122 = vld [vmem:[%s1121] sm:$0xff]
        %v1123 = vld [vmem:[%s302 + $0x3] sm:$0x1]
        %v1124 = vld [vmem:[%s302 + $0x7] sm:$0x1]
        %v1125 = vld [vmem:[%s302 + $0xb] sm:$0x1]
        %v1126 = vld [vmem:[%s302 + $0xf] sm:$0x1]
        %v1127 = vld [vmem:[%s302 + $0x13] sm:$0x1]
        %v1128 = vld [vmem:[%s302 + $0x17] sm:$0x1]
        %v1129 = vld [vmem:[%s302 + $0x1b] sm:$0x1]
        %v1130 = vld [vmem:[%s302 + $0x1f] sm:$0x1]
        %v1132 = vsel %vm376, %v1120, 0
        %v1135 = vsel %vm376, %v1122, 0
        %1137 = vmatprep.subr.mxu0 0.0
        %1138 = vmatpush1.xpose.msra.mxu0 0.0
        %1139 = vmatprep.subr.mxu0 0.0
        %1140 = vmatpush1.xpose.msra.mxu0 0.0
        %1141 = vmatprep.subr.mxu0 0.0
        %1142 = vmatpush1.xpose.msra.mxu0 0.0
        %1143 = vmatprep.subr.mxu0 0.0
        %1144 = vmatpush1.xpose.msra.mxu0 0.0
        %1145 = vmatprep.subr.mxu0 0.0
        %1146 = vmatpush1.xpose.msra.mxu0 0.0
        %1147 = vmatprep.subr.mxu0 0.0
        %1148 = vmatpush1.xpose.msra.mxu0 0.0
        %1149 = vmatprep.subr.mxu0 0.0
        %1150 = vmatpush1.xpose.msra.mxu0 0.0
        %1151 = vmatprep.subr.mxu0 0.0
        %1152 = vmatpush1.xpose.msra.mxu0 0.0
        %1153 = vmatprep.subr.mxu0 0.0
        %1154 = vmatpush1.xpose.msra.mxu0 0.0
        %1155 = vmatprep.subr.mxu0 0.0
        %1156 = vmatpush1.xpose.msra.mxu0 0.0
        %1157 = vmatprep.subr.mxu0 0.0
        %1158 = vmatpush1.xpose.msra.mxu0 0.0
        %1159 = vmatprep.subr.mxu0 0.0
        %1160 = vmatpush1.xpose.msra.mxu0 0.0
        %1161 = vmatprep.subr.mxu0 0.0
        %1162 = vmatpush1.xpose.msra.mxu0 0.0
        %1163 = vmatprep.subr.mxu0 0.0
        %1164 = vmatpush1.xpose.msra.mxu0 0.0
        %1165 = vmatprep.subr.mxu0 0.0
        %1166 = vmatpush1.xpose.msra.mxu0 0.0
        %1167 = vmatprep.subr.mxu0 0.0
        %1168 = vmatpush1.xpose.msra.mxu0 %v1135
        %1169 = vmatprep.subr.mxu0 0.0
        %1170 = vmatpush2.xpose.msra.mxu0 0.0
        %1171 = vmatprep.subr.mxu0 0.0
        %1172 = vmatpush2.xpose.msra.mxu0 0.0
        %1173 = vmatprep.subr.mxu0 0.0
        %1174 = vmatpush2.xpose.msra.mxu0 0.0
        %1175 = vmatprep.subr.mxu0 0.0
        %1176 = vmatpush2.xpose.msra.mxu0 0.0
        %1177 = vmatprep.subr.mxu0 0.0
        %1178 = vmatpush2.xpose.msra.mxu0 0.0
        %1179 = vmatprep.subr.mxu0 0.0
        %1180 = vmatpush2.xpose.msra.mxu0 0.0
        %1181 = vmatprep.subr.mxu0 0.0
        %1182 = vmatpush2.xpose.msra.mxu0 0.0
        %1183 = vmatprep.subr.mxu0 0.0
        %1184 = vmatpush2.xpose.msra.mxu0 0.0
        %1185 = vmatprep.subr.mxu0 0.0
        %1186 = vmatpush2.xpose.msra.mxu0 0.0
        %1187 = vmatprep.subr.mxu0 0.0
        %1188 = vmatpush2.xpose.msra.mxu0 0.0
        %1189 = vmatprep.subr.mxu0 0.0
        %1190 = vmatpush2.xpose.msra.mxu0 0.0
        %1191 = vmatprep.subr.mxu0 0.0
        %1192 = vmatpush2.xpose.msra.mxu0 0.0
        %1193 = vmatprep.subr.mxu0 0.0
        %1194 = vmatpush2.xpose.msra.mxu0 0.0
        %1195 = vmatprep.subr.mxu0 0.0
        %1196 = vmatpush2.xpose.msra.mxu0 0.0
        %1197 = vmatprep.subr.mxu0 0.0
        %1198 = vmatpush2.xpose.msra.mxu0 0.0
        %1199 = vmatprep.subr.mxu0 0.0
        %1200 = vmatpush2.xpose.msra.mxu0 0.0
        %1201 = vmatprep.mubr.f32.mxu0 0.0
        %1202 = vmatmul.mubr.f32.gmra.mxu0 %v1132
        %v1203 = vpop.f32.mrf.mxu0
        %v1204 = vadd.f32 0.0, %v1203
        %v1205 = vpop.f32.mrf.mxu0
        %1206 = vdwg.mxu0
        %v1207 = vmul.f32 %v1120, %v1120
        %v1208 = vsel %vm376, %v1207, 0.0
        %1209 = vadd.xlane.f32.xlu0 %v1208
        %v1210 = vpop.xlane.xlu0 %1209
        %v1211 = vmul.f32 %v1122, %v1122
        %v1212 = vsel %vm376, %v1211, 0.0
        %1213 = vadd.xlane.f32.xlu0 %v1212
        %v1214 = vpop.xlane.xlu0 %1213
        %1215 = vxpose.xlu0.b32.start [1/16] %v1214, 128
        %1216 = vxpose.xlu0.b32.cont [2/16] 0.0, 128
        %1217 = vxpose.xlu0.b32.cont [3/16] 0.0, 128
        %1218 = vxpose.xlu0.b32.cont [4/16] 0.0, 128
        %1219 = vxpose.xlu0.b32.cont [5/16] 0.0, 128
        %1220 = vxpose.xlu0.b32.cont [6/16] 0.0, 128
        %1221 = vxpose.xlu0.b32.cont [7/16] 0.0, 128
        %1222 = vxpose.xlu0.b32.cont [8/16] 0.0, 128
        %1223 = vxpose.xlu0.b32.cont [9/16] 0.0, 128
        %1224 = vxpose.xlu0.b32.cont [10/16] 0.0, 128
        %1225 = vxpose.xlu0.b32.cont [11/16] 0.0, 128
        %1226 = vxpose.xlu0.b32.cont [12/16] 0.0, 128
        %1227 = vxpose.xlu0.b32.cont [13/16] 0.0, 128
        %1228 = vxpose.xlu0.b32.cont [14/16] 0.0, 128
        %1229 = vxpose.xlu0.b32.cont [15/16] 0.0, 128
        %1230 = vxpose.xlu0.b32.end [16/16] 0.0, 128
        %v1231 = vpop.trf.xlu0
        %v1232 = vpop.trf.xlu0
        %v1233 = vpop.trf.xlu0
        %v1234 = vpop.trf.xlu0
        %v1235 = vpop.trf.xlu0
        %v1236 = vpop.trf.xlu0
        %v1237 = vpop.trf.xlu0
        %v1238 = vpop.trf.xlu0
        %v1239 = vpop.trf.xlu0
        %v1240 = vpop.trf.xlu0
        %v1241 = vpop.trf.xlu0
        %v1242 = vpop.trf.xlu0
        %v1243 = vpop.trf.xlu0
        %v1244 = vpop.trf.xlu0
        %v1245 = vpop.trf.xlu0
        %v1246 = vpop.trf.xlu0
        %v1247 = vlaneseq
        %v1248 = vshrl.u32 %v1247, 7
        %v1249 = vsub.s32 0, %v1248
        %v1250 = vrot.slane %v1231, %v1249
        %v1251 = vadd.f32 %v1210, %v1250
        %v1252 = vmul.f32 %v1204, 2.0
        %v1253 = vsub.f32 %v1251, %v1252
        %v1254 = vmax.f32 %v1253, 0.0
        %v1255 = vmul.f32 %v1254, -0.088388346
        %v1256 = vmul.f32 %v1255, 1.442695
        %v1257 = vpow.pop %v1256
        %v1258 = vmul.f32 %v1257, %v508
        %s1259 = scalar_lea.vmem [#allocation3], 24
        %v1260 = vld [vmem:[%s1259] sm:$0xff]
        %v1261 = vsel %vm512, %v1258, 0.0
        %1262 = vadd.xlane.f32.xlu0 %v1261
        %v1263 = vpop.xlane.xlu0 %1262
        %v1264 = vadd.f32 %v1260, %v1263
        %1265 = vst.msk [vmem:[%s1259] sm:$0xff] %vm517, %v1264
        %s1266 = scalar_lea.vmem [#allocation2], 24
        %v1267 = vld [vmem:[%s1266] sm:$0xff]
        %v1276 = vrot.slane %v1124, 7
        %v1277 = vsel %vm529, %v1276, %v1123
        %v1278 = vrot.slane %v1125, 6
        %v1279 = vsel %vm532, %v1278, %v1277
        %v1280 = vrot.slane %v1126, 5
        %v1281 = vsel %vm535, %v1280, %v1279
        %v1282 = vrot.slane %v1127, 4
        %v1283 = vsel %vm538, %v1282, %v1281
        %v1284 = vrot.slane %v1128, 3
        %v1285 = vsel %vm541, %v1284, %v1283
        %v1286 = vrot.slane %v1129, 2
        %v1287 = vsel %vm544, %v1286, %v1285
        %v1288 = vrot.slane %v1130, 1
        %v1289 = vsel %vm547, %v1288, %v1287
        %v1292 = vsel %vm512, %v1258, 0
        %1294 = vmatprep.subr.mxu0 0.0
        %1295 = vmatpush1.msra.mxu0 0.0
        %1296 = vmatprep.subr.mxu0 0.0
        %1297 = vmatpush1.msra.mxu0 0.0
        %1298 = vmatprep.subr.mxu0 0.0
        %1299 = vmatpush1.msra.mxu0 0.0
        %1300 = vmatprep.subr.mxu0 0.0
        %1301 = vmatpush1.msra.mxu0 0.0
        %1302 = vmatprep.subr.mxu0 0.0
        %1303 = vmatpush1.msra.mxu0 0.0
        %1304 = vmatprep.subr.mxu0 0.0
        %1305 = vmatpush1.msra.mxu0 0.0
        %1306 = vmatprep.subr.mxu0 0.0
        %1307 = vmatpush1.msra.mxu0 0.0
        %1308 = vmatprep.subr.mxu0 0.0
        %1309 = vmatpush1.msra.mxu0 0.0
        %1310 = vmatprep.subr.mxu0 0.0
        %1311 = vmatpush1.msra.mxu0 0.0
        %1312 = vmatprep.subr.mxu0 0.0
        %1313 = vmatpush1.msra.mxu0 0.0
        %1314 = vmatprep.subr.mxu0 0.0
        %1315 = vmatpush1.msra.mxu0 0.0
        %1316 = vmatprep.subr.mxu0 0.0
        %1317 = vmatpush1.msra.mxu0 0.0
        %1318 = vmatprep.subr.mxu0 0.0
        %1319 = vmatpush1.msra.mxu0 0.0
        %1320 = vmatprep.subr.mxu0 0.0
        %1321 = vmatpush1.msra.mxu0 0.0
        %1322 = vmatprep.subr.mxu0 0.0
        %1323 = vmatpush1.msra.mxu0 0.0
        %1324 = vmatprep.subr.mxu0 0.0
        %1325 = vmatpush1.msra.mxu0 %v1289
        %1326 = vmatprep.subr.mxu0 0.0
        %1327 = vmatpush2.msra.mxu0 0.0
        %1328 = vmatprep.subr.mxu0 0.0
        %1329 = vmatpush2.msra.mxu0 0.0
        %1330 = vmatprep.subr.mxu0 0.0
        %1331 = vmatpush2.msra.mxu0 0.0
        %1332 = vmatprep.subr.mxu0 0.0
        %1333 = vmatpush2.msra.mxu0 0.0
        %1334 = vmatprep.subr.mxu0 0.0
        %1335 = vmatpush2.msra.mxu0 0.0
        %1336 = vmatprep.subr.mxu0 0.0
        %1337 = vmatpush2.msra.mxu0 0.0
        %1338 = vmatprep.subr.mxu0 0.0
        %1339 = vmatpush2.msra.mxu0 0.0
        %1340 = vmatprep.subr.mxu0 0.0
        %1341 = vmatpush2.msra.mxu0 0.0
        %1342 = vmatprep.subr.mxu0 0.0
        %1343 = vmatpush2.msra.mxu0 0.0
        %1344 = vmatprep.subr.mxu0 0.0
        %1345 = vmatpush2.msra.mxu0 0.0
        %1346 = vmatprep.subr.mxu0 0.0
        %1347 = vmatpush2.msra.mxu0 0.0
        %1348 = vmatprep.subr.mxu0 0.0
        %1349 = vmatpush2.msra.mxu0 0.0
        %1350 = vmatprep.subr.mxu0 0.0
        %1351 = vmatpush2.msra.mxu0 0.0
        %1352 = vmatprep.subr.mxu0 0.0
        %1353 = vmatpush2.msra.mxu0 0.0
        %1354 = vmatprep.subr.mxu0 0.0
        %1355 = vmatpush2.msra.mxu0 0.0
        %1356 = vmatprep.subr.mxu0 0.0
        %1357 = vmatpush2.msra.mxu0 0.0
        %1358 = vmatprep.mubr.f32.mxu0 0.0
        %1359 = vmatmul.mubr.f32.gmra.mxu0 %v1292
        %v1360 = vpop.f32.mrf.mxu0
        %v1361 = vadd.f32 0.0, %v1360
        %v1362 = vpop.f32.mrf.mxu0
        %1363 = vdwg.mxu0
        %v1364 = vadd.f32 %v1267, %v1361
        %1365 = vst.msk [vmem:[%s1266] sm:$0xff] %vm376, %v1364
        // Predicated region
        $region53: #{tpu_custom_call.1} parent=35 // pred_check
          %p1366 = pneg %p351
        $region54: #{tpu_custom_call.1} parent=35 // pred_check_branch
          %1368 = sbr.rel (%p1366) target = $region56
        $region55: #{tpu_custom_call.1} parent=35 // pred_region
          %v1369 = vld [vmem:[#allocation3] sm:$0xff]
          %v1370 = vadd.f32 %v1369, 1e-06
          %v1371 = vrcp.pop %v1370
          %v1372 = vld [vmem:[#allocation2] sm:$0xff]
          %1374 = vset.pattern.permute.xlu0 0
          %1375 = vperm.xlu0 %1374, %v1371
          %v1376 = vpop.permute.xlu0 %1375
          %v1378 = vmul.f32 %v1372, %v1376
          %v1380 = vcombine.high %v1378, %v1378
          %v1382 = vunpack.c.l.s4 1966171168
          %v1383 = vunpack.c.0.s8 %v1382
          %v1384 = vlaneseq
          %v1385 = vshrl.u32 %v1384, 7
          %v1386 = vsub.s32 %v1383, %v1385
          %v1387 = vrot.slane %v1378, %v1386
          %v1389 = vunpack.c.l.s4 1966171168
          %v1390 = vunpack.c.0.s8 %v1389
          %v1391 = vlaneseq
          %v1392 = vshrl.u32 %v1391, 7
          %v1393 = vsub.s32 %v1390, %v1392
          %v1394 = vrot.slane %v1380, %v1393
          %v1395 = vcombine.high %v1387, %v1387
          %v1396 = vcombine.high %v1394, %v1394
          %v1398 = vunpack.c.l.s4 1966171168
          %v1399 = vunpack.c.0.s8 %v1398
          %v1400 = vlaneseq
          %v1401 = vshrl.u32 %v1400, 7
          %v1402 = vsub.s32 %v1399, %v1401
          %v1403 = vrot.slane %v1387, %v1402
          %v1405 = vunpack.c.l.s4 1966171168
          %v1406 = vunpack.c.0.s8 %v1405
          %v1407 = vlaneseq
          %v1408 = vshrl.u32 %v1407, 7
          %v1409 = vsub.s32 %v1406, %v1408
          %v1410 = vrot.slane %v1394, %v1409
          %v1412 = vunpack.c.l.s4 1966171168
          %v1413 = vunpack.c.0.s8 %v1412
          %v1414 = vlaneseq
          %v1415 = vshrl.u32 %v1414, 7
          %v1416 = vsub.s32 %v1413, %v1415
          %v1417 = vrot.slane %v1395, %v1416
          %v1419 = vunpack.c.l.s4 1966171168
          %v1420 = vunpack.c.0.s8 %v1419
          %v1421 = vlaneseq
          %v1422 = vshrl.u32 %v1421, 7
          %v1423 = vsub.s32 %v1420, %v1422
          %v1424 = vrot.slane %v1396, %v1423
          %v1425 = vcombine.high %v1403, %v1403
          %v1426 = vcombine.high %v1410, %v1410
          %v1427 = vcombine.high %v1417, %v1417
          %v1428 = vcombine.high %v1424, %v1424
          %vm1437 = vcmask 253952
          %1438 = vst.msk [vmem:[%s342] sm:$0x1] %vm1437, %v1403
          %1439 = vst.msk [vmem:[%s342 + $0x4] sm:$0x1] %vm1437, %v1417
          %1440 = vst.msk [vmem:[%s342 + $0x8] sm:$0x1] %vm1437, %v1425
          %1441 = vst.msk [vmem:[%s342 + $0xc] sm:$0x1] %vm1437, %v1427
          %1442 = vst.msk [vmem:[%s342 + $0x10] sm:$0x1] %vm1437, %v1410
          %1443 = vst.msk [vmem:[%s342 + $0x14] sm:$0x1] %vm1437, %v1424
          %1444 = vst.msk [vmem:[%s342 + $0x18] sm:$0x1] %vm1437, %v1426
          %1445 = vst.msk [vmem:[%s342 + $0x1c] sm:$0x1] %vm1437, %v1428
          %v1446 = vld [vmem:[%s765] sm:$0xff]
          %v1447 = vadd.f32 %v1446, 1e-06
          %v1448 = vrcp.pop %v1447
          %v1449 = vld [vmem:[%s772] sm:$0xff]
          %1451 = vset.pattern.permute.xlu0 0
          %1452 = vperm.xlu0 %1451, %v1448
          %v1453 = vpop.permute.xlu0 %1452
          %v1455 = vmul.f32 %v1449, %v1453
          %v1457 = vcombine.high %v1455, %v1455
          %v1459 = vunpack.c.l.s4 1966171168
          %v1460 = vunpack.c.0.s8 %v1459
          %v1461 = vlaneseq
          %v1462 = vshrl.u32 %v1461, 7
          %v1463 = vsub.s32 %v1460, %v1462
          %v1464 = vrot.slane %v1455, %v1463
          %v1466 = vunpack.c.l.s4 1966171168
          %v1467 = vunpack.c.0.s8 %v1466
          %v1468 = vlaneseq
          %v1469 = vshrl.u32 %v1468, 7
          %v1470 = vsub.s32 %v1467, %v1469
          %v1471 = vrot.slane %v1457, %v1470
          %v1472 = vcombine.high %v1464, %v1464
          %v1473 = vcombine.high %v1471, %v1471
          %v1475 = vunpack.c.l.s4 1966171168
          %v1476 = vunpack.c.0.s8 %v1475
          %v1477 = vlaneseq
          %v1478 = vshrl.u32 %v1477, 7
          %v1479 = vsub.s32 %v1476, %v1478
          %v1480 = vrot.slane %v1464, %v1479
          %v1482 = vunpack.c.l.s4 1966171168
          %v1483 = vunpack.c.0.s8 %v1482
          %v1484 = vlaneseq
          %v1485 = vshrl.u32 %v1484, 7
          %v1486 = vsub.s32 %v1483, %v1485
          %v1487 = vrot.slane %v1471, %v1486
          %v1489 = vunpack.c.l.s4 1966171168
          %v1490 = vunpack.c.0.s8 %v1489
          %v1491 = vlaneseq
          %v1492 = vshrl.u32 %v1491, 7
          %v1493 = vsub.s32 %v1490, %v1492
          %v1494 = vrot.slane %v1472, %v1493
          %v1496 = vunpack.c.l.s4 1966171168
          %v1497 = vunpack.c.0.s8 %v1496
          %v1498 = vlaneseq
          %v1499 = vshrl.u32 %v1498, 7
          %v1500 = vsub.s32 %v1497, %v1499
          %v1501 = vrot.slane %v1473, %v1500
          %v1502 = vcombine.high %v1480, %v1480
          %v1503 = vcombine.high %v1487, %v1487
          %v1504 = vcombine.high %v1494, %v1494
          %v1505 = vcombine.high %v1501, %v1501
          %1514 = vst.msk [vmem:[%s342 + $0x1] sm:$0x1] %vm1437, %v1480
          %1515 = vst.msk [vmem:[%s342 + $0x5] sm:$0x1] %vm1437, %v1494
          %1516 = vst.msk [vmem:[%s342 + $0x9] sm:$0x1] %vm1437, %v1502
          %1517 = vst.msk [vmem:[%s342 + $0xd] sm:$0x1] %vm1437, %v1504
          %1518 = vst.msk [vmem:[%s342 + $0x11] sm:$0x1] %vm1437, %v1487
          %1519 = vst.msk [vmem:[%s342 + $0x15] sm:$0x1] %vm1437, %v1501
          %1520 = vst.msk [vmem:[%s342 + $0x19] sm:$0x1] %vm1437, %v1503
          %1521 = vst.msk [vmem:[%s342 + $0x1d] sm:$0x1] %vm1437, %v1505
          %v1522 = vld [vmem:[%s1012] sm:$0xff]
          %v1523 = vadd.f32 %v1522, 1e-06
          %v1524 = vrcp.pop %v1523
          %v1525 = vld [vmem:[%s1019] sm:$0xff]
          %1527 = vset.pattern.permute.xlu0 0
          %1528 = vperm.xlu0 %1527, %v1524
          %v1529 = vpop.permute.xlu0 %1528
          %v1531 = vmul.f32 %v1525, %v1529
          %v1533 = vcombine.high %v1531, %v1531
          %v1535 = vunpack.c.l.s4 1966171168
          %v1536 = vunpack.c.0.s8 %v1535
          %v1537 = vlaneseq
          %v1538 = vshrl.u32 %v1537, 7
          %v1539 = vsub.s32 %v1536, %v1538
          %v1540 = vrot.slane %v1531, %v1539
          %v1542 = vunpack.c.l.s4 1966171168
          %v1543 = vunpack.c.0.s8 %v1542
          %v1544 = vlaneseq
          %v1545 = vshrl.u32 %v1544, 7
          %v1546 = vsub.s32 %v1543, %v1545
          %v1547 = vrot.slane %v1533, %v1546
          %v1548 = vcombine.high %v1540, %v1540
          %v1549 = vcombine.high %v1547, %v1547
          %v1551 = vunpack.c.l.s4 1966171168
          %v1552 = vunpack.c.0.s8 %v1551
          %v1553 = vlaneseq
          %v1554 = vshrl.u32 %v1553, 7
          %v1555 = vsub.s32 %v1552, %v1554
          %v1556 = vrot.slane %v1540, %v1555
          %v1558 = vunpack.c.l.s4 1966171168
          %v1559 = vunpack.c.0.s8 %v1558
          %v1560 = vlaneseq
          %v1561 = vshrl.u32 %v1560, 7
          %v1562 = vsub.s32 %v1559, %v1561
          %v1563 = vrot.slane %v1547, %v1562
          %v1565 = vunpack.c.l.s4 1966171168
          %v1566 = vunpack.c.0.s8 %v1565
          %v1567 = vlaneseq
          %v1568 = vshrl.u32 %v1567, 7
          %v1569 = vsub.s32 %v1566, %v1568
          %v1570 = vrot.slane %v1548, %v1569
          %v1572 = vunpack.c.l.s4 1966171168
          %v1573 = vunpack.c.0.s8 %v1572
          %v1574 = vlaneseq
          %v1575 = vshrl.u32 %v1574, 7
          %v1576 = vsub.s32 %v1573, %v1575
          %v1577 = vrot.slane %v1549, %v1576
          %v1578 = vcombine.high %v1556, %v1556
          %v1579 = vcombine.high %v1563, %v1563
          %v1580 = vcombine.high %v1570, %v1570
          %v1581 = vcombine.high %v1577, %v1577
          %1590 = vst.msk [vmem:[%s342 + $0x2] sm:$0x1] %vm1437, %v1556
          %1591 = vst.msk [vmem:[%s342 + $0x6] sm:$0x1] %vm1437, %v1570
          %1592 = vst.msk [vmem:[%s342 + $0xa] sm:$0x1] %vm1437, %v1578
          %1593 = vst.msk [vmem:[%s342 + $0xe] sm:$0x1] %vm1437, %v1580
          %1594 = vst.msk [vmem:[%s342 + $0x12] sm:$0x1] %vm1437, %v1563
          %1595 = vst.msk [vmem:[%s342 + $0x16] sm:$0x1] %vm1437, %v1577
          %1596 = vst.msk [vmem:[%s342 + $0x1a] sm:$0x1] %vm1437, %v1579
          %1597 = vst.msk [vmem:[%s342 + $0x1e] sm:$0x1] %vm1437, %v1581
          %v1598 = vld [vmem:[%s1259] sm:$0xff]
          %v1599 = vadd.f32 %v1598, 1e-06
          %v1600 = vrcp.pop %v1599
          %v1601 = vld [vmem:[%s1266] sm:$0xff]
          %1603 = vset.pattern.permute.xlu0 0
          %1604 = vperm.xlu0 %1603, %v1600
          %v1605 = vpop.permute.xlu0 %1604
          %v1607 = vmul.f32 %v1601, %v1605
          %v1609 = vcombine.high %v1607, %v1607
          %v1611 = vunpack.c.l.s4 1966171168
          %v1612 = vunpack.c.0.s8 %v1611
          %v1613 = vlaneseq
          %v1614 = vshrl.u32 %v1613, 7
          %v1615 = vsub.s32 %v1612, %v1614
          %v1616 = vrot.slane %v1607, %v1615
          %v1618 = vunpack.c.l.s4 1966171168
          %v1619 = vunpack.c.0.s8 %v1618
          %v1620 = vlaneseq
          %v1621 = vshrl.u32 %v1620, 7
          %v1622 = vsub.s32 %v1619, %v1621
          %v1623 = vrot.slane %v1609, %v1622
          %v1624 = vcombine.high %v1616, %v1616
          %v1625 = vcombine.high %v1623, %v1623
          %v1627 = vunpack.c.l.s4 1966171168
          %v1628 = vunpack.c.0.s8 %v1627
          %v1629 = vlaneseq
          %v1630 = vshrl.u32 %v1629, 7
          %v1631 = vsub.s32 %v1628, %v1630
          %v1632 = vrot.slane %v1616, %v1631
          %v1634 = vunpack.c.l.s4 1966171168
          %v1635 = vunpack.c.0.s8 %v1634
          %v1636 = vlaneseq
          %v1637 = vshrl.u32 %v1636, 7
          %v1638 = vsub.s32 %v1635, %v1637
          %v1639 = vrot.slane %v1623, %v1638
          %v1641 = vunpack.c.l.s4 1966171168
          %v1642 = vunpack.c.0.s8 %v1641
          %v1643 = vlaneseq
          %v1644 = vshrl.u32 %v1643, 7
          %v1645 = vsub.s32 %v1642, %v1644
          %v1646 = vrot.slane %v1624, %v1645
          %v1648 = vunpack.c.l.s4 1966171168
          %v1649 = vunpack.c.0.s8 %v1648
          %v1650 = vlaneseq
          %v1651 = vshrl.u32 %v1650, 7
          %v1652 = vsub.s32 %v1649, %v1651
          %v1653 = vrot.slane %v1625, %v1652
          %v1654 = vcombine.high %v1632, %v1632
          %v1655 = vcombine.high %v1639, %v1639
          %v1656 = vcombine.high %v1646, %v1646
          %v1657 = vcombine.high %v1653, %v1653
          %1666 = vst.msk [vmem:[%s342 + $0x3] sm:$0x1] %vm1437, %v1632
          %1667 = vst.msk [vmem:[%s342 + $0x7] sm:$0x1] %vm1437, %v1646
          %1668 = vst.msk [vmem:[%s342 + $0xb] sm:$0x1] %vm1437, %v1654
          %1669 = vst.msk [vmem:[%s342 + $0xf] sm:$0x1] %vm1437, %v1656
          %1670 = vst.msk [vmem:[%s342 + $0x13] sm:$0x1] %vm1437, %v1639
          %1671 = vst.msk [vmem:[%s342 + $0x17] sm:$0x1] %vm1437, %v1653
          %1672 = vst.msk [vmem:[%s342 + $0x1b] sm:$0x1] %vm1437, %v1655
          %1673 = vst.msk [vmem:[%s342 + $0x1f] sm:$0x1] %vm1437, %v1657
        $region56: #{tpu_custom_call.1} parent=35 // pred_fallthru
          _
        %s1674 = sand.u32 %s165, 1
        %s1675 = scalar_lea.sflag [#allocation6], %s1674
        %s1676 = sand.u32 %s165, 1
        %s1677 = smul.addr %s1676, 32
        %s1678 = scalar_lea.vmem [#allocation10], %s1677
        // Predicated region
        $region57: #{tpu_custom_call.1} parent=35 // pred_check
          %p1679 = pneg %p175
        $region58: #{tpu_custom_call.1} parent=35 // pred_check_branch
          %1681 = sbr.rel (%p1679) target = $region60
        $region59: #{tpu_custom_call.1} parent=35 // pred_region
          %s1682 = smul.u32 8, %s30
          %s1684 = ssub.s32 512, 512
          %1685 = vsyncadd %s1675, %s1684
          %s1686 = smul.addr %s29, 8
          %s1687 = sadd.s32 %s1682, %s1686
          %s1688 = smul.addr %s1687, 64
          %s1689 = scalar_lea.hbm %s4, %s1688
          %s1690 = sshll.u32 %s1678, 4
          %s1691 = int_to_ptr.vmem [resolvable:$true] %s1690
          %1696 = dma.vmem_to_hbm [thread:$0]  %s1691, 512, %s1689, %s1675, 64, 64, 4
        $region60: #{tpu_custom_call.1} parent=35 // pred_fallthru
          _
      $region36: #{tpu_custom_call.1} parent=5 // pred_fallthru
        _
      %p1697 = scmp.le.s32.totalorder 2, %s19
      // Predicated region
      $region61: #{tpu_custom_call.1} parent=5 // pred_check
        %p1698 = pneg %p1697
      $region62: #{tpu_custom_call.1} parent=5 // pred_check_branch
        %1700 = sbr.rel (%p1698) target = $region64
      $region63: #{tpu_custom_call.1} parent=5 // pred_region
        %s1701 = ssub.s32 %s19, 2
        // Predicated region
        $region65: #{tpu_custom_call.1} parent=63 // pred_check
          %p1702 = pneg %p181
        $region66: #{tpu_custom_call.1} parent=63 // pred_check_branch
          %1704 = sbr.rel (%p1702) target = $region68
        $region67: #{tpu_custom_call.1} parent=63 // pred_region
          %s1705 = sand.u32 %s166, 1
          %s1706 = scalar_lea.sflag [#allocation6], %s1705
          %s1707 = sand.u32 %s166, 1
          %s1708 = smul.addr %s1707, 32
          %s1709 = scalar_lea.vmem [#allocation10], %s1708
          %1710 = dma.done %s1706, 512
        $region68: #{tpu_custom_call.1} parent=63 // pred_fallthru
          _
      $region64: #{tpu_custom_call.1} parent=5 // pred_fallthru
        _
    $region6: #{tpu_custom_call.1} parent=1 // loop_footer
      %s23 = sadd.s32 1, %s19
    $region7: #{tpu_custom_call.1} parent=1 // loop_footer_branch
      %18 = sbr.rel target = $region3
    $region8: #{tpu_custom_call.1} parent=1 // loop_exit
      _
    %1711 = vsyncpa [#allocation5], 1
    %s1712 = scalar_lea.sflag [#allocation5], 1
    %1713 = vsyncpa %s1712, 1
    %1714 = vsyncpa [#allocation8], 1
    %s1715 = scalar_lea.sflag [#allocation8], 1
    %1716 = vsyncpa %s1715, 1
    %1717 = vsyncpa [#allocation6], 1
    %s1718 = scalar_lea.sflag [#allocation6], 1
    %1719 = vsyncpa %s1718, 1

</llo_original>
